<compile_context>
chip_gen: v7x
topology: tpu7x:2x2x1
jax: 0.10.0
libtpu: 0.0.40
codegen_flags: <defaults>
</compile_context>

<pallas_src>
import jax
import jax.numpy as jnp
import numpy as np
from jax import lax
from jax.experimental import pallas as pl
from jax.experimental.pallas import tpu as pltpu


def _round_up(x, m):
    return ((x + m - 1) // m) * m


def lstm_fc_kernel(tok_ref, embproj_ref, whh_ref, b_ref, wfc_ref, bfc_ref,
                   out_ref, xp_ref):
    """Fused embedding + LSTM + FC + sigmoid.

    tok_ref:     (T*Bp, 1)   int32 token ids, time-major (row r = t*Bp + b)
    embproj_ref: (Vp, 4*Hp)  precomputed  embedding @ W_ih^T, gate-blocks lane-aligned
    whh_ref:     (Hp, 4*Hp)  W_hh^T, same gate layout, rows zero-padded
    b_ref:       (1, 4*Hp)   b_ih + b_hh, gate blocks lane-aligned
    wfc_ref:     (1, Hp)     FC weight row (zero-padded)
    bfc_ref:     (1, 1)      FC bias
    out_ref:     (Bp, 128)   lane-dense output (sigmoid broadcast across lanes)
    xp_ref:      (T*Bp, 4*Hp) VMEM scratch: fused embedding-lookup + input projection
    """
    TB = tok_ref.shape[0]
    Vp = embproj_ref.shape[0]
    Hp = whh_ref.shape[0]
    Bp = out_ref.shape[0]
    T = TB // Bp

    # --- Fused embedding gather + input projection + bias: ONE MXU matmul. ---
    # one-hot(tokens) @ (embedding @ W_ih^T): exact row selection (1.0/0.0 weights),
    # replaces the wrapper-side gather/transpose/pad/reshape chain entirely.
    vocab_iota = lax.broadcasted_iota(jnp.int32, (TB, Vp), 1)
    onehot = (tok_ref[...] == vocab_iota).astype(jnp.float32)          # (TB, Vp)
    xp_ref[...] = (
        jnp.dot(onehot, embproj_ref[...], preferred_element_type=jnp.float32)
        + b_ref[...]
    )

    h = jnp.zeros((Bp, Hp), jnp.float32)
    c = jnp.zeros((Bp, Hp), jnp.float32)

    # T is a small static trip count -> static Python unroll (all slices static).
    for t in range(T):
        # whh_ref is re-read from VMEM every step (NOT hoisted): a (128,512) f32 value
        # is the entire vreg file, and a Python unroll does not bound live ranges.
        # (Further step: stage the RHS once with pltpu.matmul_push_rhs / matmul_acc_lhs
        #  to avoid re-pushing weight tiles each step; skipped for lowering robustness.)
        gates = xp_ref[t * Bp:(t + 1) * Bp, :] + jnp.dot(
            h, whh_ref[...], preferred_element_type=jnp.float32
        )  # (Bp, 4*Hp)
        # Lane-aligned gate slices (Hp == 128 -> full vregs, no masked selects).
        i = jax.nn.sigmoid(gates[:, 0:Hp])
        f = jax.nn.sigmoid(gates[:, Hp:2 * Hp])
        g = jnp.tanh(gates[:, 2 * Hp:3 * Hp])
        o = jax.nn.sigmoid(gates[:, 3 * Hp:4 * Hp])
        c = f * c + i * g
        h = o * jnp.tanh(c)

    # --- Final FC as VPU multiply + lane reduction (skip a wasteful (Hp,1) MXU pass). ---
    logits = jnp.sum(h * wfc_ref[...], axis=-1, keepdims=True) + bfc_ref[...]  # (Bp, 1)
    # Lane-dense output write (unmasked store); wrapper slices [:B, 0].
    out_ref[...] = jnp.broadcast_to(jax.nn.sigmoid(logits), out_ref.shape)


def prepare_params(params):
    """One-time weight preprocessing (hoisted out of the per-call forward path)."""
    V, E = params["embedding"].shape
    H = params["w_hh"].shape[1]                            # hidden_dim (w_hh is (4H, H))
    H_pad = _round_up(max(H, 128), 128)                    # lane-align each gate block
    V_pad = _round_up(max(V, 128), 128)                    # lane/contraction-align vocab

    def pad_gate_cols(w):
        # (rows, 4H) -> (rows, 4*H_pad): each gate block [i,f,g,o] zero-padded to H_pad.
        rows = w.shape[0]
        w4 = w.reshape(rows, 4, H)
        w4 = jnp.pad(w4, ((0, 0), (0, 0), (0, H_pad - H)))
        return w4.reshape(rows, 4 * H_pad)

    # Fold embedding table and W_ih into a single pre-projected table (exact: each row
    # of emb_proj is the same f32 contraction the reference computes per token).
    emb_proj = params["embedding"].astype(jnp.float32) @ params["w_ih"].T.astype(jnp.float32)
    emb_proj = pad_gate_cols(emb_proj)                               # (V, 4*H_pad)
    emb_proj = jnp.pad(emb_proj, ((0, V_pad - V), (0, 0)))           # (V_pad, 4*H_pad)

    whh_t = pad_gate_cols(params["w_hh"].T.astype(jnp.float32))      # (H, 4*H_pad)
    whh_t = jnp.pad(whh_t, ((0, H_pad - H), (0, 0)))                 # (H_pad, 4*H_pad)

    bias = (params["b_ih"] + params["b_hh"]).reshape(1, 4 * H).astype(jnp.float32)
    bias = pad_gate_cols(bias)                                       # (1, 4*H_pad)

    wfc = jnp.pad(params["w_fc"].astype(jnp.float32),
                  ((0, 0), (0, H_pad - H)))                          # (1, H_pad)
    bfc = params["b_fc"].reshape(1, 1).astype(jnp.float32)           # (1, 1)

    return {"emb_proj": emb_proj, "whh": whh_t, "bias": bias, "wfc": wfc, "bfc": bfc}


def scam_detector_forward(tokens, prep):
    """tokens: (B, T) int32. prep: output of prepare_params. Returns (B,) sigmoid probs."""
    B, T = tokens.shape
    G4 = prep["whh"].shape[1]                              # 4 * H_pad
    B_pad = _round_up(max(B, 8), 8)                        # sublane-align batch

    # Only trivial int32 token layout remains in the hot path (64 ints).
    tok = jnp.pad(tokens, ((0, B_pad - B), (0, 0)))        # (Bp, T); padded rows are
    tok_tb = tok.T.reshape(T * B_pad, 1).astype(jnp.int32)  # independent & sliced off.

    vmem = pl.BlockSpec(memory_space=pltpu.MemorySpace.VMEM)
    out = pl.pallas_call(
        lstm_fc_kernel,
        out_shape=jax.ShapeDtypeStruct((B_pad, 128), jnp.float32),
        in_specs=[vmem] * 6,
        out_specs=vmem,
        scratch_shapes=[pltpu.VMEM((T * B_pad, G4), jnp.float32)],
    )(tok_tb, prep["emb_proj"], prep["whh"], prep["bias"], prep["wfc"], prep["bfc"])

    return out[:B, 0]                                      # matches torch .squeeze()


def reference_forward(tokens, params):
    """Pure-JAX reference (same math as torch nn.Embedding + nn.LSTM + Linear + sigmoid)."""
    emb = params["embedding"][tokens].astype(jnp.float32)  # (B, T, E)
    B, T, E = emb.shape
    H = params["w_hh"].shape[1]
    h = jnp.zeros((B, H), jnp.float32)
    c = jnp.zeros((B, H), jnp.float32)
    bias = params["b_ih"] + params["b_hh"]
    for t in range(T):
        gates = emb[:, t, :] @ params["w_ih"].T + h @ params["w_hh"].T + bias
        i = jax.nn.sigmoid(gates[:, 0:H])
        f = jax.nn.sigmoid(gates[:, H:2 * H])
        g = jnp.tanh(gates[:, 2 * H:3 * H])
        o = jax.nn.sigmoid(gates[:, 3 * H:4 * H])
        c = f * c + i * g
        h = o * jnp.tanh(c)
    logits = h @ params["w_fc"].T + params["b_fc"]
    return jax.nn.sigmoid(logits).squeeze(-1)


def init_params(key, vocab_size, embed_dim, hidden_dim):
    ks = jax.random.split(key, 7)
    k_inv = 1.0 / np.sqrt(hidden_dim)
    return {
        "embedding": jax.random.normal(ks[0], (vocab_size, embed_dim), jnp.float32),
        "w_ih": jax.random.uniform(ks[1], (4 * hidden_dim, embed_dim), jnp.float32, -k_inv, k_inv),
        "w_hh": jax.random.uniform(ks[2], (4 * hidden_dim, hidden_dim), jnp.float32, -k_inv, k_inv),
        "b_ih": jax.random.uniform(ks[3], (4 * hidden_dim,), jnp.float32, -k_inv, k_inv),
        "b_hh": jax.random.uniform(ks[4], (4 * hidden_dim,), jnp.float32, -k_inv, k_inv),
        "w_fc": jax.random.uniform(ks[5], (1, hidden_dim), jnp.float32, -k_inv, k_inv),
        "b_fc": jax.random.uniform(ks[6], (1,), jnp.float32, -k_inv, k_inv),
    }


if __name__ == "__main__":
    VOCAB, EMBED, HIDDEN = 64, 128, 64
    BATCH, SEQ = 2, 8

    key = jax.random.PRNGKey(0)
    k_tok, k_par = jax.random.split(key)
    tokens = jax.random.randint(k_tok, (BATCH, SEQ), 0, VOCAB, dtype=jnp.int32)
    params = init_params(k_par, VOCAB, EMBED, HIDDEN)

    prep = jax.tree_util.tree_map(jax.block_until_ready, prepare_params(params))  # one-time
    fwd = jax.jit(scam_detector_forward)

    out = jax.block_until_ready(fwd(tokens, prep))
    ref = jax.block_until_ready(reference_forward(tokens, params))
    np.testing.assert_allclose(np.asarray(out), np.asarray(ref), rtol=1e-5, atol=1e-5)

    print("KERNEL_OK")
</pallas_src>

<mosaic_0001>
module attributes {stable_mosaic.version = 11 : i64} {
  func.func @lstm_fc_kernel(%arg0: memref<64x1xi32, #tpu.memory_space<vmem>>, %arg1: memref<128x512xf32, #tpu.memory_space<vmem>>, %arg2: memref<128x512xf32, #tpu.memory_space<vmem>>, %arg3: memref<1x512xf32, #tpu.memory_space<vmem>>, %arg4: memref<1x128xf32, #tpu.memory_space<vmem>>, %arg5: memref<1x1xf32, #tpu.memory_space<vmem>>, %arg6: memref<8x128xf32, #tpu.memory_space<vmem>>, %arg7: memref<64x512xf32, #tpu.memory_space<vmem>>) attributes {dimension_semantics = [], scalar_prefetch = 0 : i64, scratch_operands = 1 : i64, tpu.core_type = #tpu.core_type<tc>} {
    %0 = tpu.iota {dimensions = array<i32: 1>} : vector<64x128xi32>
    %c0 = arith.constant 0 : index
    %c0_0 = arith.constant 0 : index
    %1 = vector.load %arg0[%c0, %c0_0] : memref<64x1xi32, #tpu.memory_space<vmem>>, vector<64x1xi32>
    %2 = vector.broadcast %1 : vector<64x1xi32> to vector<64x128xi32>
    %3 = arith.cmpi eq, %2, %0 : vector<64x128xi32>
    %4 = arith.extui %3 : vector<64x128xi1> to vector<64x128xi32>
    %5 = arith.sitofp %4 : vector<64x128xi32> to vector<64x128xf32>
    %c0_1 = arith.constant 0 : index
    %c0_2 = arith.constant 0 : index
    %6 = vector.load %arg1[%c0_1, %c0_2] : memref<128x512xf32, #tpu.memory_space<vmem>>, vector<128x512xf32>
    %cst = arith.constant dense<0.000000e+00> : vector<64x512xf32>
    %7 = tpu.matmul %5, %6, %cst {dimension_numbers = #tpu.dot_dimension_numbers<[1], [0], [0], [1], [0, 0, 1, 1], [], []>} : vector<64x128xf32>, vector<128x512xf32>, vector<64x512xf32> -> vector<64x512xf32>
    %c0_3 = arith.constant 0 : index
    %c0_4 = arith.constant 0 : index
    %8 = vector.load %arg3[%c0_3, %c0_4] : memref<1x512xf32, #tpu.memory_space<vmem>>, vector<1x512xf32>
    %9 = vector.broadcast %8 : vector<1x512xf32> to vector<64x512xf32>
    %10 = arith.addf %7, %9 : vector<64x512xf32>
    %c0_5 = arith.constant 0 : index
    %c0_6 = arith.constant 0 : index
    %11 = vector.load %arg7[%c0_5, %c0_6] : memref<64x512xf32, #tpu.memory_space<vmem>>, vector<64x512xf32>
    tpu.vector_store %arg7[%c0_5, %c0_6], %10 {strides = array<i32>} : memref<64x512xf32, #tpu.memory_space<vmem>>, vector<64x512xf32>,
    %cst_7 = arith.constant 0.000000e+00 : f32
    %12 = vector.broadcast %cst_7 : f32 to vector<8x128xf32>
    %cst_8 = arith.constant 0.000000e+00 : f32
    %13 = vector.broadcast %cst_8 : f32 to vector<8x128xf32>
    %c0_9 = arith.constant 0 : index
    %c0_10 = arith.constant 0 : index
    %14 = vector.load %arg7[%c0_9, %c0_10] : memref<64x512xf32, #tpu.memory_space<vmem>>, vector<8x512xf32>
    %c0_11 = arith.constant 0 : index
    %c0_12 = arith.constant 0 : index
    %15 = vector.load %arg2[%c0_11, %c0_12] : memref<128x512xf32, #tpu.memory_space<vmem>>, vector<128x512xf32>
    %cst_13 = arith.constant dense<0.000000e+00> : vector<8x512xf32>
    %16 = tpu.matmul %12, %15, %cst_13 {dimension_numbers = #tpu.dot_dimension_numbers<[1], [0], [0], [1], [0, 0, 1, 1], [], []>} : vector<8x128xf32>, vector<128x512xf32>, vector<8x512xf32> -> vector<8x512xf32>
    %17 = arith.addf %14, %16 : vector<8x512xf32>
    %18 = vector.extract_strided_slice %17 {offsets = [0, 0], sizes = [8, 128], strides = [1, 1]} : vector<8x512xf32> to vector<8x128xf32>
    %19 = arith.negf %18 : vector<8x128xf32>
    %20 = math.exp %19 : vector<8x128xf32>
    %cst_14 = arith.constant 1.000000e+00 : f32
    %21 = vector.broadcast %cst_14 : f32 to vector<8x128xf32>
    %22 = arith.addf %21, %20 : vector<8x128xf32>
    %23 = arith.divf %21, %22 : vector<8x128xf32>
    %24 = vector.extract_strided_slice %17 {offsets = [0, 128], sizes = [8, 128], strides = [1, 1]} : vector<8x512xf32> to vector<8x128xf32>
    %25 = arith.negf %24 : vector<8x128xf32>
    %26 = math.exp %25 : vector<8x128xf32>
    %cst_15 = arith.constant 1.000000e+00 : f32
    %27 = vector.broadcast %cst_15 : f32 to vector<8x128xf32>
    %28 = arith.addf %27, %26 : vector<8x128xf32>
    %29 = arith.divf %27, %28 : vector<8x128xf32>
    %30 = vector.extract_strided_slice %17 {offsets = [0, 256], sizes = [8, 128], strides = [1, 1]} : vector<8x512xf32> to vector<8x128xf32>
    %31 = math.tanh %30 : vector<8x128xf32>
    %32 = vector.extract_strided_slice %17 {offsets = [0, 384], sizes = [8, 128], strides = [1, 1]} : vector<8x512xf32> to vector<8x128xf32>
    %33 = arith.negf %32 : vector<8x128xf32>
    %34 = math.exp %33 : vector<8x128xf32>
    %cst_16 = arith.constant 1.000000e+00 : f32
    %35 = vector.broadcast %cst_16 : f32 to vector<8x128xf32>
    %36 = arith.addf %35, %34 : vector<8x128xf32>
    %37 = arith.divf %35, %36 : vector<8x128xf32>
    %38 = arith.mulf %29, %13 : vector<8x128xf32>
    %39 = arith.mulf %23, %31 : vector<8x128xf32>
    %40 = arith.addf %38, %39 : vector<8x128xf32>
    %41 = math.tanh %40 : vector<8x128xf32>
    %42 = arith.mulf %37, %41 : vector<8x128xf32>
    %c8 = arith.constant 8 : index
    %c0_17 = arith.constant 0 : index
    %43 = vector.load %arg7[%c8, %c0_17] : memref<64x512xf32, #tpu.memory_space<vmem>>, vector<8x512xf32>
    %c0_18 = arith.constant 0 : index
    %c0_19 = arith.constant 0 : index
    %44 = vector.load %arg2[%c0_18, %c0_19] : memref<128x512xf32, #tpu.memory_space<vmem>>, vector<128x512xf32>
    %cst_20 = arith.constant dense<0.000000e+00> : vector<8x512xf32>
    %45 = tpu.matmul %42, %44, %cst_20 {dimension_numbers = #tpu.dot_dimension_numbers<[1], [0], [0], [1], [0, 0, 1, 1], [], []>} : vector<8x128xf32>, vector<128x512xf32>, vector<8x512xf32> -> vector<8x512xf32>
    %46 = arith.addf %43, %45 : vector<8x512xf32>
    %47 = vector.extract_strided_slice %46 {offsets = [0, 0], sizes = [8, 128], strides = [1, 1]} : vector<8x512xf32> to vector<8x128xf32>
    %48 = arith.negf %47 : vector<8x128xf32>
    %49 = math.exp %48 : vector<8x128xf32>
    %cst_21 = arith.constant 1.000000e+00 : f32
    %50 = vector.broadcast %cst_21 : f32 to vector<8x128xf32>
    %51 = arith.addf %50, %49 : vector<8x128xf32>
    %52 = arith.divf %50, %51 : vector<8x128xf32>
    %53 = vector.extract_strided_slice %46 {offsets = [0, 128], sizes = [8, 128], strides = [1, 1]} : vector<8x512xf32> to vector<8x128xf32>
    %54 = arith.negf %53 : vector<8x128xf32>
    %55 = math.exp %54 : vector<8x128xf32>
    %cst_22 = arith.constant 1.000000e+00 : f32
    %56 = vector.broadcast %cst_22 : f32 to vector<8x128xf32>
    %57 = arith.addf %56, %55 : vector<8x128xf32>
    %58 = arith.divf %56, %57 : vector<8x128xf32>
    %59 = vector.extract_strided_slice %46 {offsets = [0, 256], sizes = [8, 128], strides = [1, 1]} : vector<8x512xf32> to vector<8x128xf32>
    %60 = math.tanh %59 : vector<8x128xf32>
    %61 = vector.extract_strided_slice %46 {offsets = [0, 384], sizes = [8, 128], strides = [1, 1]} : vector<8x512xf32> to vector<8x128xf32>
    %62 = arith.negf %61 : vector<8x128xf32>
    %63 = math.exp %62 : vector<8x128xf32>
    %cst_23 = arith.constant 1.000000e+00 : f32
    %64 = vector.broadcast %cst_23 : f32 to vector<8x128xf32>
    %65 = arith.addf %64, %63 : vector<8x128xf32>
    %66 = arith.divf %64, %65 : vector<8x128xf32>
    %67 = arith.mulf %58, %40 : vector<8x128xf32>
    %68 = arith.mulf %52, %60 : vector<8x128xf32>
    %69 = arith.addf %67, %68 : vector<8x128xf32>
    %70 = math.tanh %69 : vector<8x128xf32>
    %71 = arith.mulf %66, %70 : vector<8x128xf32>
    %c16 = arith.constant 16 : index
    %c0_24 = arith.constant 0 : index
    %72 = vector.load %arg7[%c16, %c0_24] : memref<64x512xf32, #tpu.memory_space<vmem>>, vector<8x512xf32>
    %c0_25 = arith.constant 0 : index
    %c0_26 = arith.constant 0 : index
    %73 = vector.load %arg2[%c0_25, %c0_26] : memref<128x512xf32, #tpu.memory_space<vmem>>, vector<128x512xf32>
    %cst_27 = arith.constant dense<0.000000e+00> : vector<8x512xf32>
    %74 = tpu.matmul %71, %73, %cst_27 {dimension_numbers = #tpu.dot_dimension_numbers<[1], [0], [0], [1], [0, 0, 1, 1], [], []>} : vector<8x128xf32>, vector<128x512xf32>, vector<8x512xf32> -> vector<8x512xf32>
    %75 = arith.addf %72, %74 : vector<8x512xf32>
    %76 = vector.extract_strided_slice %75 {offsets = [0, 0], sizes = [8, 128], strides = [1, 1]} : vector<8x512xf32> to vector<8x128xf32>
    %77 = arith.negf %76 : vector<8x128xf32>
    %78 = math.exp %77 : vector<8x128xf32>
    %cst_28 = arith.constant 1.000000e+00 : f32
    %79 = vector.broadcast %cst_28 : f32 to vector<8x128xf32>
    %80 = arith.addf %79, %78 : vector<8x128xf32>
    %81 = arith.divf %79, %80 : vector<8x128xf32>
    %82 = vector.extract_strided_slice %75 {offsets = [0, 128], sizes = [8, 128], strides = [1, 1]} : vector<8x512xf32> to vector<8x128xf32>
    %83 = arith.negf %82 : vector<8x128xf32>
    %84 = math.exp %83 : vector<8x128xf32>
    %cst_29 = arith.constant 1.000000e+00 : f32
    %85 = vector.broadcast %cst_29 : f32 to vector<8x128xf32>
    %86 = arith.addf %85, %84 : vector<8x128xf32>
    %87 = arith.divf %85, %86 : vector<8x128xf32>
    %88 = vector.extract_strided_slice %75 {offsets = [0, 256], sizes = [8, 128], strides = [1, 1]} : vector<8x512xf32> to vector<8x128xf32>
    %89 = math.tanh %88 : vector<8x128xf32>
    %90 = vector.extract_strided_slice %75 {offsets = [0, 384], sizes = [8, 128], strides = [1, 1]} : vector<8x512xf32> to vector<8x128xf32>
    %91 = arith.negf %90 : vector<8x128xf32>
    %92 = math.exp %91 : vector<8x128xf32>
    %cst_30 = arith.constant 1.000000e+00 : f32
    %93 = vector.broadcast %cst_30 : f32 to vector<8x128xf32>
    %94 = arith.addf %93, %92 : vector<8x128xf32>
    %95 = arith.divf %93, %94 : vector<8x128xf32>
    %96 = arith.mulf %87, %69 : vector<8x128xf32>
    %97 = arith.mulf %81, %89 : vector<8x128xf32>
    %98 = arith.addf %96, %97 : vector<8x128xf32>
    %99 = math.tanh %98 : vector<8x128xf32>
    %100 = arith.mulf %95, %99 : vector<8x128xf32>
    %c24 = arith.constant 24 : index
    %c0_31 = arith.constant 0 : index
    %101 = vector.load %arg7[%c24, %c0_31] : memref<64x512xf32, #tpu.memory_space<vmem>>, vector<8x512xf32>
    %c0_32 = arith.constant 0 : index
    %c0_33 = arith.constant 0 : index
    %102 = vector.load %arg2[%c0_32, %c0_33] : memref<128x512xf32, #tpu.memory_space<vmem>>, vector<128x512xf32>
    %cst_34 = arith.constant dense<0.000000e+00> : vector<8x512xf32>
    %103 = tpu.matmul %100, %102, %cst_34 {dimension_numbers = #tpu.dot_dimension_numbers<[1], [0], [0], [1], [0, 0, 1, 1], [], []>} : vector<8x128xf32>, vector<128x512xf32>, vector<8x512xf32> -> vector<8x512xf32>
    %104 = arith.addf %101, %103 : vector<8x512xf32>
    %105 = vector.extract_strided_slice %104 {offsets = [0, 0], sizes = [8, 128], strides = [1, 1]} : vector<8x512xf32> to vector<8x128xf32>
    %106 = arith.negf %105 : vector<8x128xf32>
    %107 = math.exp %106 : vector<8x128xf32>
    %cst_35 = arith.constant 1.000000e+00 : f32
    %108 = vector.broadcast %cst_35 : f32 to vector<8x128xf32>
    %109 = arith.addf %108, %107 : vector<8x128xf32>
    %110 = arith.divf %108, %109 : vector<8x128xf32>
    %111 = vector.extract_strided_slice %104 {offsets = [0, 128], sizes = [8, 128], strides = [1, 1]} : vector<8x512xf32> to vector<8x128xf32>
    %112 = arith.negf %111 : vector<8x128xf32>
    %113 = math.exp %112 : vector<8x128xf32>
    %cst_36 = arith.constant 1.000000e+00 : f32
    %114 = vector.broadcast %cst_36 : f32 to vector<8x128xf32>
    %115 = arith.addf %114, %113 : vector<8x128xf32>
    %116 = arith.divf %114, %115 : vector<8x128xf32>
    %117 = vector.extract_strided_slice %104 {offsets = [0, 256], sizes = [8, 128], strides = [1, 1]} : vector<8x512xf32> to vector<8x128xf32>
    %118 = math.tanh %117 : vector<8x128xf32>
    %119 = vector.extract_strided_slice %104 {offsets = [0, 384], sizes = [8, 128], strides = [1, 1]} : vector<8x512xf32> to vector<8x128xf32>
    %120 = arith.negf %119 : vector<8x128xf32>
    %121 = math.exp %120 : vector<8x128xf32>
    %cst_37 = arith.constant 1.000000e+00 : f32
    %122 = vector.broadcast %cst_37 : f32 to vector<8x128xf32>
    %123 = arith.addf %122, %121 : vector<8x128xf32>
    %124 = arith.divf %122, %123 : vector<8x128xf32>
    %125 = arith.mulf %116, %98 : vector<8x128xf32>
    %126 = arith.mulf %110, %118 : vector<8x128xf32>
    %127 = arith.addf %125, %126 : vector<8x128xf32>
    %128 = math.tanh %127 : vector<8x128xf32>
    %129 = arith.mulf %124, %128 : vector<8x128xf32>
    %c32 = arith.constant 32 : index
    %c0_38 = arith.constant 0 : index
    %130 = vector.load %arg7[%c32, %c0_38] : memref<64x512xf32, #tpu.memory_space<vmem>>, vector<8x512xf32>
    %c0_39 = arith.constant 0 : index
    %c0_40 = arith.constant 0 : index
    %131 = vector.load %arg2[%c0_39, %c0_40] : memref<128x512xf32, #tpu.memory_space<vmem>>, vector<128x512xf32>
    %cst_41 = arith.constant dense<0.000000e+00> : vector<8x512xf32>
    %132 = tpu.matmul %129, %131, %cst_41 {dimension_numbers = #tpu.dot_dimension_numbers<[1], [0], [0], [1], [0, 0, 1, 1], [], []>} : vector<8x128xf32>, vector<128x512xf32>, vector<8x512xf32> -> vector<8x512xf32>
    %133 = arith.addf %130, %132 : vector<8x512xf32>
    %134 = vector.extract_strided_slice %133 {offsets = [0, 0], sizes = [8, 128], strides = [1, 1]} : vector<8x512xf32> to vector<8x128xf32>
    %135 = arith.negf %134 : vector<8x128xf32>
    %136 = math.exp %135 : vector<8x128xf32>
    %cst_42 = arith.constant 1.000000e+00 : f32
    %137 = vector.broadcast %cst_42 : f32 to vector<8x128xf32>
    %138 = arith.addf %137, %136 : vector<8x128xf32>
    %139 = arith.divf %137, %138 : vector<8x128xf32>
    %140 = vector.extract_strided_slice %133 {offsets = [0, 128], sizes = [8, 128], strides = [1, 1]} : vector<8x512xf32> to vector<8x128xf32>
    %141 = arith.negf %140 : vector<8x128xf32>
    %142 = math.exp %141 : vector<8x128xf32>
    %cst_43 = arith.constant 1.000000e+00 : f32
    %143 = vector.broadcast %cst_43 : f32 to vector<8x128xf32>
    %144 = arith.addf %143, %142 : vector<8x128xf32>
    %145 = arith.divf %143, %144 : vector<8x128xf32>
    %146 = vector.extract_strided_slice %133 {offsets = [0, 256], sizes = [8, 128], strides = [1, 1]} : vector<8x512xf32> to vector<8x128xf32>
    %147 = math.tanh %146 : vector<8x128xf32>
    %148 = vector.extract_strided_slice %133 {offsets = [0, 384], sizes = [8, 128], strides = [1, 1]} : vector<8x512xf32> to vector<8x128xf32>
    %149 = arith.negf %148 : vector<8x128xf32>
    %150 = math.exp %149 : vector<8x128xf32>
    %cst_44 = arith.constant 1.000000e+00 : f32
    %151 = vector.broadcast %cst_44 : f32 to vector<8x128xf32>
    %152 = arith.addf %151, %150 : vector<8x128xf32>
    %153 = arith.divf %151, %152 : vector<8x128xf32>
    %154 = arith.mulf %145, %127 : vector<8x128xf32>
    %155 = arith.mulf %139, %147 : vector<8x128xf32>
    %156 = arith.addf %154, %155 : vector<8x128xf32>
    %157 = math.tanh %156 : vector<8x128xf32>
    %158 = arith.mulf %153, %157 : vector<8x128xf32>
    %c40 = arith.constant 40 : index
    %c0_45 = arith.constant 0 : index
    %159 = vector.load %arg7[%c40, %c0_45] : memref<64x512xf32, #tpu.memory_space<vmem>>, vector<8x512xf32>
    %c0_46 = arith.constant 0 : index
    %c0_47 = arith.constant 0 : index
    %160 = vector.load %arg2[%c0_46, %c0_47] : memref<128x512xf32, #tpu.memory_space<vmem>>, vector<128x512xf32>
    %cst_48 = arith.constant dense<0.000000e+00> : vector<8x512xf32>
    %161 = tpu.matmul %158, %160, %cst_48 {dimension_numbers = #tpu.dot_dimension_numbers<[1], [0], [0], [1], [0, 0, 1, 1], [], []>} : vector<8x128xf32>, vector<128x512xf32>, vector<8x512xf32> -> vector<8x512xf32>
    %162 = arith.addf %159, %161 : vector<8x512xf32>
    %163 = vector.extract_strided_slice %162 {offsets = [0, 0], sizes = [8, 128], strides = [1, 1]} : vector<8x512xf32> to vector<8x128xf32>
    %164 = arith.negf %163 : vector<8x128xf32>
    %165 = math.exp %164 : vector<8x128xf32>
    %cst_49 = arith.constant 1.000000e+00 : f32
    %166 = vector.broadcast %cst_49 : f32 to vector<8x128xf32>
    %167 = arith.addf %166, %165 : vector<8x128xf32>
    %168 = arith.divf %166, %167 : vector<8x128xf32>
    %169 = vector.extract_strided_slice %162 {offsets = [0, 128], sizes = [8, 128], strides = [1, 1]} : vector<8x512xf32> to vector<8x128xf32>
    %170 = arith.negf %169 : vector<8x128xf32>
    %171 = math.exp %170 : vector<8x128xf32>
    %cst_50 = arith.constant 1.000000e+00 : f32
    %172 = vector.broadcast %cst_50 : f32 to vector<8x128xf32>
    %173 = arith.addf %172, %171 : vector<8x128xf32>
    %174 = arith.divf %172, %173 : vector<8x128xf32>
    %175 = vector.extract_strided_slice %162 {offsets = [0, 256], sizes = [8, 128], strides = [1, 1]} : vector<8x512xf32> to vector<8x128xf32>
    %176 = math.tanh %175 : vector<8x128xf32>
    %177 = vector.extract_strided_slice %162 {offsets = [0, 384], sizes = [8, 128], strides = [1, 1]} : vector<8x512xf32> to vector<8x128xf32>
    %178 = arith.negf %177 : vector<8x128xf32>
    %179 = math.exp %178 : vector<8x128xf32>
    %cst_51 = arith.constant 1.000000e+00 : f32
    %180 = vector.broadcast %cst_51 : f32 to vector<8x128xf32>
    %181 = arith.addf %180, %179 : vector<8x128xf32>
    %182 = arith.divf %180, %181 : vector<8x128xf32>
    %183 = arith.mulf %174, %156 : vector<8x128xf32>
    %184 = arith.mulf %168, %176 : vector<8x128xf32>
    %185 = arith.addf %183, %184 : vector<8x128xf32>
    %186 = math.tanh %185 : vector<8x128xf32>
    %187 = arith.mulf %182, %186 : vector<8x128xf32>
    %c48 = arith.constant 48 : index
    %c0_52 = arith.constant 0 : index
    %188 = vector.load %arg7[%c48, %c0_52] : memref<64x512xf32, #tpu.memory_space<vmem>>, vector<8x512xf32>
    %c0_53 = arith.constant 0 : index
    %c0_54 = arith.constant 0 : index
    %189 = vector.load %arg2[%c0_53, %c0_54] : memref<128x512xf32, #tpu.memory_space<vmem>>, vector<128x512xf32>
    %cst_55 = arith.constant dense<0.000000e+00> : vector<8x512xf32>
    %190 = tpu.matmul %187, %189, %cst_55 {dimension_numbers = #tpu.dot_dimension_numbers<[1], [0], [0], [1], [0, 0, 1, 1], [], []>} : vector<8x128xf32>, vector<128x512xf32>, vector<8x512xf32> -> vector<8x512xf32>
    %191 = arith.addf %188, %190 : vector<8x512xf32>
    %192 = vector.extract_strided_slice %191 {offsets = [0, 0], sizes = [8, 128], strides = [1, 1]} : vector<8x512xf32> to vector<8x128xf32>
    %193 = arith.negf %192 : vector<8x128xf32>
    %194 = math.exp %193 : vector<8x128xf32>
    %cst_56 = arith.constant 1.000000e+00 : f32
    %195 = vector.broadcast %cst_56 : f32 to vector<8x128xf32>
    %196 = arith.addf %195, %194 : vector<8x128xf32>
    %197 = arith.divf %195, %196 : vector<8x128xf32>
    %198 = vector.extract_strided_slice %191 {offsets = [0, 128], sizes = [8, 128], strides = [1, 1]} : vector<8x512xf32> to vector<8x128xf32>
    %199 = arith.negf %198 : vector<8x128xf32>
    %200 = math.exp %199 : vector<8x128xf32>
    %cst_57 = arith.constant 1.000000e+00 : f32
    %201 = vector.broadcast %cst_57 : f32 to vector<8x128xf32>
    %202 = arith.addf %201, %200 : vector<8x128xf32>
    %203 = arith.divf %201, %202 : vector<8x128xf32>
    %204 = vector.extract_strided_slice %191 {offsets = [0, 256], sizes = [8, 128], strides = [1, 1]} : vector<8x512xf32> to vector<8x128xf32>
    %205 = math.tanh %204 : vector<8x128xf32>
    %206 = vector.extract_strided_slice %191 {offsets = [0, 384], sizes = [8, 128], strides = [1, 1]} : vector<8x512xf32> to vector<8x128xf32>
    %207 = arith.negf %206 : vector<8x128xf32>
    %208 = math.exp %207 : vector<8x128xf32>
    %cst_58 = arith.constant 1.000000e+00 : f32
    %209 = vector.broadcast %cst_58 : f32 to vector<8x128xf32>
    %210 = arith.addf %209, %208 : vector<8x128xf32>
    %211 = arith.divf %209, %210 : vector<8x128xf32>
    %212 = arith.mulf %203, %185 : vector<8x128xf32>
    %213 = arith.mulf %197, %205 : vector<8x128xf32>
    %214 = arith.addf %212, %213 : vector<8x128xf32>
    %215 = math.tanh %214 : vector<8x128xf32>
    %216 = arith.mulf %211, %215 : vector<8x128xf32>
    %c56 = arith.constant 56 : index
    %c0_59 = arith.constant 0 : index
    %217 = vector.load %arg7[%c56, %c0_59] : memref<64x512xf32, #tpu.memory_space<vmem>>, vector<8x512xf32>
    %c0_60 = arith.constant 0 : index
    %c0_61 = arith.constant 0 : index
    %218 = vector.load %arg2[%c0_60, %c0_61] : memref<128x512xf32, #tpu.memory_space<vmem>>, vector<128x512xf32>
    %cst_62 = arith.constant dense<0.000000e+00> : vector<8x512xf32>
    %219 = tpu.matmul %216, %218, %cst_62 {dimension_numbers = #tpu.dot_dimension_numbers<[1], [0], [0], [1], [0, 0, 1, 1], [], []>} : vector<8x128xf32>, vector<128x512xf32>, vector<8x512xf32> -> vector<8x512xf32>
    %220 = arith.addf %217, %219 : vector<8x512xf32>
    %221 = vector.extract_strided_slice %220 {offsets = [0, 0], sizes = [8, 128], strides = [1, 1]} : vector<8x512xf32> to vector<8x128xf32>
    %222 = arith.negf %221 : vector<8x128xf32>
    %223 = math.exp %222 : vector<8x128xf32>
    %cst_63 = arith.constant 1.000000e+00 : f32
    %224 = vector.broadcast %cst_63 : f32 to vector<8x128xf32>
    %225 = arith.addf %224, %223 : vector<8x128xf32>
    %226 = arith.divf %224, %225 : vector<8x128xf32>
    %227 = vector.extract_strided_slice %220 {offsets = [0, 128], sizes = [8, 128], strides = [1, 1]} : vector<8x512xf32> to vector<8x128xf32>
    %228 = arith.negf %227 : vector<8x128xf32>
    %229 = math.exp %228 : vector<8x128xf32>
    %cst_64 = arith.constant 1.000000e+00 : f32
    %230 = vector.broadcast %cst_64 : f32 to vector<8x128xf32>
    %231 = arith.addf %230, %229 : vector<8x128xf32>
    %232 = arith.divf %230, %231 : vector<8x128xf32>
    %233 = vector.extract_strided_slice %220 {offsets = [0, 256], sizes = [8, 128], strides = [1, 1]} : vector<8x512xf32> to vector<8x128xf32>
    %234 = math.tanh %233 : vector<8x128xf32>
    %235 = vector.extract_strided_slice %220 {offsets = [0, 384], sizes = [8, 128], strides = [1, 1]} : vector<8x512xf32> to vector<8x128xf32>
    %236 = arith.negf %235 : vector<8x128xf32>
    %237 = math.exp %236 : vector<8x128xf32>
    %cst_65 = arith.constant 1.000000e+00 : f32
    %238 = vector.broadcast %cst_65 : f32 to vector<8x128xf32>
    %239 = arith.addf %238, %237 : vector<8x128xf32>
    %240 = arith.divf %238, %239 : vector<8x128xf32>
    %241 = arith.mulf %232, %214 : vector<8x128xf32>
    %242 = arith.mulf %226, %234 : vector<8x128xf32>
    %243 = arith.addf %241, %242 : vector<8x128xf32>
    %244 = math.tanh %243 : vector<8x128xf32>
    %245 = arith.mulf %240, %244 : vector<8x128xf32>
    %c0_66 = arith.constant 0 : index
    %c0_67 = arith.constant 0 : index
    %246 = vector.load %arg4[%c0_66, %c0_67] : memref<1x128xf32, #tpu.memory_space<vmem>>, vector<1x128xf32>
    %247 = vector.broadcast %246 : vector<1x128xf32> to vector<8x128xf32>
    %248 = arith.mulf %245, %247 : vector<8x128xf32>
    %cst_68 = arith.constant dense<0.000000e+00> : vector<8xf32>
    %249 = vector.multi_reduction <add>, %248, %cst_68 [1] : vector<8x128xf32> to vector<8xf32>
    %250 = vector.shape_cast %249 : vector<8xf32> to vector<8x1xf32>
    %c0_69 = arith.constant 0 : index
    %c0_70 = arith.constant 0 : index
    %251 = vector.load %arg5[%c0_69, %c0_70] : memref<1x1xf32, #tpu.memory_space<vmem>>, vector<1x1xf32>
    %252 = vector.broadcast %251 : vector<1x1xf32> to vector<8x1xf32>
    %253 = arith.addf %250, %252 : vector<8x1xf32>
    %254 = arith.negf %253 : vector<8x1xf32>
    %255 = math.exp %254 : vector<8x1xf32>
    %cst_71 = arith.constant 1.000000e+00 : f32
    %256 = vector.broadcast %cst_71 : f32 to vector<8x1xf32>
    %257 = arith.addf %256, %255 : vector<8x1xf32>
    %258 = arith.divf %256, %257 : vector<8x1xf32>
    %259 = vector.shape_cast %258 : vector<8x1xf32> to vector<8x1xf32>
    %260 = vector.broadcast %259 : vector<8x1xf32> to vector<8x128xf32>
    %c0_72 = arith.constant 0 : index
    %c0_73 = arith.constant 0 : index
    %261 = vector.load %arg6[%c0_72, %c0_73] : memref<8x128xf32, #tpu.memory_space<vmem>>, vector<8x128xf32>
    tpu.vector_store %arg6[%c0_72, %c0_73], %260 {strides = array<i32>} : memref<8x128xf32, #tpu.memory_space<vmem>>, vector<8x128xf32>,
    return
  }
}

</mosaic_0001>

<llo_original>
// kernel: scam_detector_forward.1
$region0: #{scam_detector_forward.1}
  #allocation0 [shape = 'u32[]', space=smem, size = 0x4, offset = 0x4, fixed_abs, tag = 'smem constant byte address 0x4 - core index']
  #allocation1 [shape = 'u32[144,128]{1,0:T(1,128)}', space=vmem, size = 0x12000, scoped, tag = 'internal scratch']
  #allocation2 [shape = 'f32[64,512]{1,0:T(8,128)}', space=vmem, size = 0x20000, scoped, tag = 'scratch operand']
  #allocation3 [shape = 'f32[1,1]{1,0:T(1,128)S(1)}', space=vmem, size = 0x200, scoped, tag = 'scoped memory for scam_detector_forward.1']
  %s0 = inlined_call_operand.vmem [shape: s32[64,1], index: 0, kind: input, shape index: {}]
  %s1 = inlined_call_operand.hbm [shape: f32[128,512], index: 1, kind: input, shape index: {}]
  %s2 = inlined_call_operand.hbm [shape: f32[128,512], index: 2, kind: input, shape index: {}]
  %s3 = inlined_call_operand.vmem [shape: f32[1,512], index: 3, kind: input, shape index: {}]
  %s4 = inlined_call_operand.vmem [shape: f32[1,128], index: 4, kind: input, shape index: {}]
  %s5 = inlined_call_operand.<no memory space> [shape: f32[1,1], index: 5, kind: input, shape index: {}]
  %s6 = inlined_call_operand.vmem [shape: f32[8,128], index: 6, kind: output, shape index: {}]
  %s7 = sld [smem:[#allocation0]]
  $region42: #{scam_detector_forward.1} parent=0
    _
  %s9 = ssub.s32 1, %s7
  %s10 = scalar_select 0, %s9, %s7
  %v11 = vstv %s5
  %12 = vst [vmem:[#allocation3] sm:$0x1] %v11
  $region1: #{scam_detector_forward.1} parent=0
    #allocation4 [shape = 'u8[262144]{0}', space=vmem, size = 0x40000, scoped, tag = 'input window, operand 1, single buffered']
    #allocation5 [shape = 's32[1]{0}', space=sflag, size = 0x4, scoped, tag = 'scoped memory for scam_detector_forward.1']
    #allocation6 [shape = 'u8[262144]{0}', space=vmem, size = 0x40000, scoped, tag = 'input window, operand 2, single buffered']
    #allocation7 [shape = 's32[1]{0}', space=sflag, size = 0x4, scoped, tag = 'scoped memory for scam_detector_forward.1']
    %13 = vsyncpa [#allocation5], 0
    %14 = vsyncpa [#allocation7], 0
    // Predicated region
    $region2: #{scam_detector_forward.1} parent=1 // pred_check
      _
    $region3: #{scam_detector_forward.1} parent=1 // pred_check_branch
      %16 = sbr.rel (0) target = $region5
    $region4: #{scam_detector_forward.1} parent=1 // pred_region
      _
    $region5: #{scam_detector_forward.1} parent=1 // pred_fallthru
      _
    // Predicated region
    $region6: #{scam_detector_forward.1} parent=1 // pred_check
      _
    $region7: #{scam_detector_forward.1} parent=1 // pred_check_branch
      %18 = sbr.rel (0) target = $region9
    $region8: #{scam_detector_forward.1} parent=1 // pred_region
      %s20 = ssub.s32 8192, 8192
      %21 = vsyncadd [#allocation5], %s20
      %s22 = sshll.u32 [#allocation4], 4
      %s23 = int_to_ptr.vmem [resolvable:$true] %s22
      %28 = dma.hbm_to_vmem [thread:$0]  %s1, 8192, %s23, [#allocation5], 512, 512, 32
    $region9: #{scam_detector_forward.1} parent=1 // pred_fallthru
      _
    // Predicated region
    $region10: #{scam_detector_forward.1} parent=1 // pred_check
      _
    $region11: #{scam_detector_forward.1} parent=1 // pred_check_branch
      %30 = sbr.rel (0) target = $region13
    $region12: #{scam_detector_forward.1} parent=1 // pred_region
      %s32 = ssub.s32 8192, 8192
      %33 = vsyncadd [#allocation7], %s32
      %s34 = sshll.u32 [#allocation6], 4
      %s35 = int_to_ptr.vmem [resolvable:$true] %s34
      %40 = dma.hbm_to_vmem [thread:$0]  %s2, 8192, %s35, [#allocation7], 512, 512, 32
    $region13: #{scam_detector_forward.1} parent=1 // pred_fallthru
      _
    // Predicated region
    $region14: #{scam_detector_forward.1} parent=1 // pred_check
      _
    $region15: #{scam_detector_forward.1} parent=1 // pred_check_branch
      %42 = sbr.rel (0) target = $region17
    $region16: #{scam_detector_forward.1} parent=1 // pred_region
      _
    $region17: #{scam_detector_forward.1} parent=1 // pred_fallthru
      _
    // Predicated region
    $region18: #{scam_detector_forward.1} parent=1 // pred_check
      _
    $region19: #{scam_detector_forward.1} parent=1 // pred_check_branch
      %44 = sbr.rel (0) target = $region21
    $region20: #{scam_detector_forward.1} parent=1 // pred_region
      _
    $region21: #{scam_detector_forward.1} parent=1 // pred_fallthru
      _
    // Predicated region
    $region22: #{scam_detector_forward.1} parent=1 // pred_check
      _
    $region23: #{scam_detector_forward.1} parent=1 // pred_check_branch
      %46 = sbr.rel (0) target = $region25
    $region24: #{scam_detector_forward.1} parent=1 // pred_region
      _
    $region25: #{scam_detector_forward.1} parent=1 // pred_fallthru
      _
    // Predicated region
    $region26: #{scam_detector_forward.1} parent=1 // pred_check
      _
    $region27: #{scam_detector_forward.1} parent=1 // pred_check_branch
      %48 = sbr.rel (0) target = $region29
    $region28: #{scam_detector_forward.1} parent=1 // pred_region
      %49 = dma.done [#allocation5], 8192
    $region29: #{scam_detector_forward.1} parent=1 // pred_fallthru
      _
    // Predicated region
    $region30: #{scam_detector_forward.1} parent=1 // pred_check
      _
    $region31: #{scam_detector_forward.1} parent=1 // pred_check_branch
      %51 = sbr.rel (0) target = $region33
    $region32: #{scam_detector_forward.1} parent=1 // pred_region
      %52 = dma.done [#allocation7], 8192
    $region33: #{scam_detector_forward.1} parent=1 // pred_fallthru
      _
    %v53 = vlaneseq
    %v54 = vand.u32 %v53, 127
    %v55 = vld [vmem:[%s0] sm:$0xff]
    %v56 = vld [vmem:[%s0 + $0x8] sm:$0xff]
    %v57 = vld [vmem:[%s0 + $0x10] sm:$0xff]
    %v58 = vld [vmem:[%s0 + $0x18] sm:$0xff]
    %v59 = vld [vmem:[%s0 + $0x20] sm:$0xff]
    %v60 = vld [vmem:[%s0 + $0x28] sm:$0xff]
    %v61 = vld [vmem:[%s0 + $0x30] sm:$0xff]
    %v62 = vld [vmem:[%s0 + $0x38] sm:$0xff]
    %63 = vset.pattern.permute.xlu0 0
    %64 = vperm.xlu0 %63, %v55
    %v65 = vpop.permute.xlu0 %64
    %66 = vset.pattern.permute.xlu0 0
    %67 = vperm.xlu0 %66, %v56
    %v68 = vpop.permute.xlu0 %67
    %69 = vset.pattern.permute.xlu0 0
    %70 = vperm.xlu0 %69, %v57
    %v71 = vpop.permute.xlu0 %70
    %72 = vset.pattern.permute.xlu0 0
    %73 = vperm.xlu0 %72, %v58
    %v74 = vpop.permute.xlu0 %73
    %75 = vset.pattern.permute.xlu0 0
    %76 = vperm.xlu0 %75, %v59
    %v77 = vpop.permute.xlu0 %76
    %78 = vset.pattern.permute.xlu0 0
    %79 = vperm.xlu0 %78, %v60
    %v80 = vpop.permute.xlu0 %79
    %81 = vset.pattern.permute.xlu0 0
    %82 = vperm.xlu0 %81, %v61
    %v83 = vpop.permute.xlu0 %82
    %84 = vset.pattern.permute.xlu0 0
    %85 = vperm.xlu0 %84, %v62
    %v86 = vpop.permute.xlu0 %85
    %vm87 = vcmp.eq.s32.totalorder %v65, %v54
    %vm88 = vcmp.eq.s32.totalorder %v68, %v54
    %vm89 = vcmp.eq.s32.totalorder %v71, %v54
    %vm90 = vcmp.eq.s32.totalorder %v74, %v54
    %vm91 = vcmp.eq.s32.totalorder %v77, %v54
    %vm92 = vcmp.eq.s32.totalorder %v80, %v54
    %vm93 = vcmp.eq.s32.totalorder %v83, %v54
    %vm94 = vcmp.eq.s32.totalorder %v86, %v54
    %v95 = vsel %vm87, 1, 0
    %v96 = vsel %vm88, 1, 0
    %v97 = vsel %vm89, 1, 0
    %v98 = vsel %vm90, 1, 0
    %v99 = vsel %vm91, 1, 0
    %v100 = vsel %vm92, 1, 0
    %v101 = vsel %vm93, 1, 0
    %v102 = vsel %vm94, 1, 0
    %v103 = vcvt.s32.f32 %v95
    %v104 = vcvt.s32.f32 %v96
    %v105 = vcvt.s32.f32 %v97
    %v106 = vcvt.s32.f32 %v98
    %v107 = vcvt.s32.f32 %v99
    %v108 = vcvt.s32.f32 %v100
    %v109 = vcvt.s32.f32 %v101
    %v110 = vcvt.s32.f32 %v102
    %v111 = vld [vmem:[#allocation4] sm:$0xff]
    %v112 = vld [vmem:[#allocation4 + $0x8] sm:$0xff]
    %v113 = vld [vmem:[#allocation4 + $0x10] sm:$0xff]
    %v114 = vld [vmem:[#allocation4 + $0x18] sm:$0xff]
    %v115 = vld [vmem:[#allocation4 + $0x20] sm:$0xff]
    %v116 = vld [vmem:[#allocation4 + $0x28] sm:$0xff]
    %v117 = vld [vmem:[#allocation4 + $0x30] sm:$0xff]
    %v118 = vld [vmem:[#allocation4 + $0x38] sm:$0xff]
    %v119 = vld [vmem:[#allocation4 + $0x40] sm:$0xff]
    %v120 = vld [vmem:[#allocation4 + $0x48] sm:$0xff]
    %v121 = vld [vmem:[#allocation4 + $0x50] sm:$0xff]
    %v122 = vld [vmem:[#allocation4 + $0x58] sm:$0xff]
    %v123 = vld [vmem:[#allocation4 + $0x60] sm:$0xff]
    %v124 = vld [vmem:[#allocation4 + $0x68] sm:$0xff]
    %v125 = vld [vmem:[#allocation4 + $0x70] sm:$0xff]
    %v126 = vld [vmem:[#allocation4 + $0x78] sm:$0xff]
    %v127 = vld [vmem:[#allocation4 + $0x80] sm:$0xff]
    %v128 = vld [vmem:[#allocation4 + $0x88] sm:$0xff]
    %v129 = vld [vmem:[#allocation4 + $0x90] sm:$0xff]
    %v130 = vld [vmem:[#allocation4 + $0x98] sm:$0xff]
    %v131 = vld [vmem:[#allocation4 + $0xa0] sm:$0xff]
    %v132 = vld [vmem:[#allocation4 + $0xa8] sm:$0xff]
    %v133 = vld [vmem:[#allocation4 + $0xb0] sm:$0xff]
    %v134 = vld [vmem:[#allocation4 + $0xb8] sm:$0xff]
    %v135 = vld [vmem:[#allocation4 + $0xc0] sm:$0xff]
    %v136 = vld [vmem:[#allocation4 + $0xc8] sm:$0xff]
    %v137 = vld [vmem:[#allocation4 + $0xd0] sm:$0xff]
    %v138 = vld [vmem:[#allocation4 + $0xd8] sm:$0xff]
    %v139 = vld [vmem:[#allocation4 + $0xe0] sm:$0xff]
    %v140 = vld [vmem:[#allocation4 + $0xe8] sm:$0xff]
    %v141 = vld [vmem:[#allocation4 + $0xf0] sm:$0xff]
    %v142 = vld [vmem:[#allocation4 + $0xf8] sm:$0xff]
    %v143 = vld [vmem:[#allocation4 + $0x100] sm:$0xff]
    %v144 = vld [vmem:[#allocation4 + $0x108] sm:$0xff]
    %v145 = vld [vmem:[#allocation4 + $0x110] sm:$0xff]
    %v146 = vld [vmem:[#allocation4 + $0x118] sm:$0xff]
    %v147 = vld [vmem:[#allocation4 + $0x120] sm:$0xff]
    %v148 = vld [vmem:[#allocation4 + $0x128] sm:$0xff]
    %v149 = vld [vmem:[#allocation4 + $0x130] sm:$0xff]
    %v150 = vld [vmem:[#allocation4 + $0x138] sm:$0xff]
    %v151 = vld [vmem:[#allocation4 + $0x140] sm:$0xff]
    %v152 = vld [vmem:[#allocation4 + $0x148] sm:$0xff]
    %v153 = vld [vmem:[#allocation4 + $0x150] sm:$0xff]
    %v154 = vld [vmem:[#allocation4 + $0x158] sm:$0xff]
    %v155 = vld [vmem:[#allocation4 + $0x160] sm:$0xff]
    %v156 = vld [vmem:[#allocation4 + $0x168] sm:$0xff]
    %v157 = vld [vmem:[#allocation4 + $0x170] sm:$0xff]
    %v158 = vld [vmem:[#allocation4 + $0x178] sm:$0xff]
    %v159 = vld [vmem:[#allocation4 + $0x180] sm:$0xff]
    %v160 = vld [vmem:[#allocation4 + $0x188] sm:$0xff]
    %v161 = vld [vmem:[#allocation4 + $0x190] sm:$0xff]
    %v162 = vld [vmem:[#allocation4 + $0x198] sm:$0xff]
    %v163 = vld [vmem:[#allocation4 + $0x1a0] sm:$0xff]
    %v164 = vld [vmem:[#allocation4 + $0x1a8] sm:$0xff]
    %v165 = vld [vmem:[#allocation4 + $0x1b0] sm:$0xff]
    %v166 = vld [vmem:[#allocation4 + $0x1b8] sm:$0xff]
    %v167 = vld [vmem:[#allocation4 + $0x1c0] sm:$0xff]
    %v168 = vld [vmem:[#allocation4 + $0x1c8] sm:$0xff]
    %v169 = vld [vmem:[#allocation4 + $0x1d0] sm:$0xff]
    %v170 = vld [vmem:[#allocation4 + $0x1d8] sm:$0xff]
    %v171 = vld [vmem:[#allocation4 + $0x1e0] sm:$0xff]
    %v172 = vld [vmem:[#allocation4 + $0x1e8] sm:$0xff]
    %v173 = vld [vmem:[#allocation4 + $0x1f0] sm:$0xff]
    %v174 = vld [vmem:[#allocation4 + $0x1f8] sm:$0xff]
    %v175 = vld [vmem:[%s3] sm:$0xf]
    %v177 = vlaneseq
    %v178 = vshrl.u32 %v177, 7
    %v179 = vsub.s32 0, %v178
    %v180 = vrot.slane %v175, %v179
    %v181 = vlaneseq
    %v182 = vshrl.u32 %v181, 7
    %v183 = vsub.s32 1, %v182
    %v184 = vrot.slane %v175, %v183
    %v185 = vlaneseq
    %v186 = vshrl.u32 %v185, 7
    %v187 = vsub.s32 2, %v186
    %v188 = vrot.slane %v175, %v187
    %v189 = vlaneseq
    %v190 = vshrl.u32 %v189, 7
    %v191 = vsub.s32 3, %v190
    %v192 = vrot.slane %v175, %v191
    %197 = vmatprep.subr.mxu0 %v112
    %198 = vmatpush1.msra.mxu0 %v111
    %199 = vmatprep.subr.mxu0 %v116
    %200 = vmatpush1.msra.mxu0 %v115
    %201 = vmatprep.subr.mxu0 %v120
    %202 = vmatpush1.msra.mxu0 %v119
    %203 = vmatprep.subr.mxu0 %v124
    %204 = vmatpush1.msra.mxu0 %v123
    %205 = vmatprep.subr.mxu0 %v128
    %206 = vmatpush1.msra.mxu0 %v127
    %207 = vmatprep.subr.mxu0 %v132
    %208 = vmatpush1.msra.mxu0 %v131
    %209 = vmatprep.subr.mxu0 %v136
    %210 = vmatpush1.msra.mxu0 %v135
    %211 = vmatprep.subr.mxu0 %v140
    %212 = vmatpush1.msra.mxu0 %v139
    %213 = vmatprep.subr.mxu0 %v144
    %214 = vmatpush1.msra.mxu0 %v143
    %215 = vmatprep.subr.mxu0 %v148
    %216 = vmatpush1.msra.mxu0 %v147
    %217 = vmatprep.subr.mxu0 %v152
    %218 = vmatpush1.msra.mxu0 %v151
    %219 = vmatprep.subr.mxu0 %v156
    %220 = vmatpush1.msra.mxu0 %v155
    %221 = vmatprep.subr.mxu0 %v160
    %222 = vmatpush1.msra.mxu0 %v159
    %223 = vmatprep.subr.mxu0 %v164
    %224 = vmatpush1.msra.mxu0 %v163
    %225 = vmatprep.subr.mxu0 %v168
    %226 = vmatpush1.msra.mxu0 %v167
    %227 = vmatprep.subr.mxu0 %v172
    %228 = vmatpush1.msra.mxu0 %v171
    %229 = vmatprep.subr.mxu0 0.0
    %230 = vmatpush1.msra.mxu0 0.0
    %231 = vmatprep.subr.mxu0 0.0
    %232 = vmatpush1.msra.mxu0 0.0
    %233 = vmatprep.subr.mxu0 0.0
    %234 = vmatpush1.msra.mxu0 0.0
    %235 = vmatprep.subr.mxu0 0.0
    %236 = vmatpush1.msra.mxu0 0.0
    %237 = vmatprep.subr.mxu0 0.0
    %238 = vmatpush1.msra.mxu0 0.0
    %239 = vmatprep.subr.mxu0 0.0
    %240 = vmatpush1.msra.mxu0 0.0
    %241 = vmatprep.subr.mxu0 0.0
    %242 = vmatpush1.msra.mxu0 0.0
    %243 = vmatprep.subr.mxu0 0.0
    %244 = vmatpush1.msra.mxu0 0.0
    %245 = vmatprep.subr.mxu0 0.0
    %246 = vmatpush1.msra.mxu0 0.0
    %247 = vmatprep.subr.mxu0 0.0
    %248 = vmatpush1.msra.mxu0 0.0
    %249 = vmatprep.subr.mxu0 0.0
    %250 = vmatpush1.msra.mxu0 0.0
    %251 = vmatprep.subr.mxu0 0.0
    %252 = vmatpush1.msra.mxu0 0.0
    %253 = vmatprep.subr.mxu0 0.0
    %254 = vmatpush1.msra.mxu0 0.0
    %255 = vmatprep.subr.mxu0 0.0
    %256 = vmatpush1.msra.mxu0 0.0
    %257 = vmatprep.subr.mxu0 0.0
    %258 = vmatpush1.msra.mxu0 0.0
    %259 = vmatprep.subr.mxu0 0.0
    %260 = vmatpush1.msra.mxu0 0.0
    %261 = vmatprep.mubr.f32.mxu0 0.0
    %262 = vmatmul.mubr.f32.gmra.mrb[0].mxu0 %v103
    %v263 = vpop.f32.mrb[0].mxu0
    %v264 = vadd.f32 %v180, %v263
    %v265 = vpop.f32.mrb[0].mxu0
    %v266 = vadd.f32 %v184, %v265
    %267 = vmatprep.mubr.f32.mxu0 0.0
    %268 = vmatmul.mubr.f32.gmra.mrb[0].mxu0 %v104
    %v269 = vpop.f32.mrb[0].mxu0
    %v270 = vadd.f32 %v180, %v269
    %v271 = vpop.f32.mrb[0].mxu0
    %v272 = vadd.f32 %v184, %v271
    %273 = vmatprep.mubr.f32.mxu0 0.0
    %274 = vmatmul.mubr.f32.gmra.mrb[0].mxu0 %v105
    %v275 = vpop.f32.mrb[0].mxu0
    %v276 = vadd.f32 %v180, %v275
    %v277 = vpop.f32.mrb[0].mxu0
    %v278 = vadd.f32 %v184, %v277
    %279 = vmatprep.mubr.f32.mxu0 0.0
    %280 = vmatmul.mubr.f32.gmra.mrb[0].mxu0 %v106
    %v281 = vpop.f32.mrb[0].mxu0
    %v282 = vadd.f32 %v180, %v281
    %v283 = vpop.f32.mrb[0].mxu0
    %v284 = vadd.f32 %v184, %v283
    %285 = vmatprep.mubr.f32.mxu0 0.0
    %286 = vmatmul.mubr.f32.gmra.mrb[0].mxu0 %v107
    %v287 = vpop.f32.mrb[0].mxu0
    %v288 = vadd.f32 %v180, %v287
    %v289 = vpop.f32.mrb[0].mxu0
    %v290 = vadd.f32 %v184, %v289
    %291 = vmatprep.mubr.f32.mxu0 0.0
    %292 = vmatmul.mubr.f32.gmra.mrb[0].mxu0 %v108
    %v293 = vpop.f32.mrb[0].mxu0
    %v294 = vadd.f32 %v180, %v293
    %v295 = vpop.f32.mrb[0].mxu0
    %v296 = vadd.f32 %v184, %v295
    %297 = vmatprep.mubr.f32.mxu0 0.0
    %298 = vmatmul.mubr.f32.gmra.mrb[0].mxu0 %v109
    %v299 = vpop.f32.mrb[0].mxu0
    %v300 = vadd.f32 %v180, %v299
    %v301 = vpop.f32.mrb[0].mxu0
    %v302 = vadd.f32 %v184, %v301
    %303 = vmatprep.mubr.f32.mxu0 0.0
    %304 = vmatmul.mubr.f32.gmra.mrb[0].mxu0 %v110
    %v305 = vpop.f32.mrb[0].mxu0
    %v306 = vadd.f32 %v180, %v305
    %v307 = vpop.f32.mrb[0].mxu0
    %v308 = vadd.f32 %v184, %v307
    %309 = vdwg.mxu0
    %310 = vmatprep.subr.mxu0 %v114
    %311 = vmatpush1.msra.mxu0 %v113
    %312 = vmatprep.subr.mxu0 %v118
    %313 = vmatpush1.msra.mxu0 %v117
    %314 = vmatprep.subr.mxu0 %v122
    %315 = vmatpush1.msra.mxu0 %v121
    %316 = vmatprep.subr.mxu0 %v126
    %317 = vmatpush1.msra.mxu0 %v125
    %318 = vmatprep.subr.mxu0 %v130
    %319 = vmatpush1.msra.mxu0 %v129
    %320 = vmatprep.subr.mxu0 %v134
    %321 = vmatpush1.msra.mxu0 %v133
    %322 = vmatprep.subr.mxu0 %v138
    %323 = vmatpush1.msra.mxu0 %v137
    %324 = vmatprep.subr.mxu0 %v142
    %325 = vmatpush1.msra.mxu0 %v141
    %326 = vmatprep.subr.mxu0 %v146
    %327 = vmatpush1.msra.mxu0 %v145
    %328 = vmatprep.subr.mxu0 %v150
    %329 = vmatpush1.msra.mxu0 %v149
    %330 = vmatprep.subr.mxu0 %v154
    %331 = vmatpush1.msra.mxu0 %v153
    %332 = vmatprep.subr.mxu0 %v158
    %333 = vmatpush1.msra.mxu0 %v157
    %334 = vmatprep.subr.mxu0 %v162
    %335 = vmatpush1.msra.mxu0 %v161
    %336 = vmatprep.subr.mxu0 %v166
    %337 = vmatpush1.msra.mxu0 %v165
    %338 = vmatprep.subr.mxu0 %v170
    %339 = vmatpush1.msra.mxu0 %v169
    %340 = vmatprep.subr.mxu0 %v174
    %341 = vmatpush1.msra.mxu0 %v173
    %342 = vmatprep.subr.mxu0 0.0
    %343 = vmatpush1.msra.mxu0 0.0
    %344 = vmatprep.subr.mxu0 0.0
    %345 = vmatpush1.msra.mxu0 0.0
    %346 = vmatprep.subr.mxu0 0.0
    %347 = vmatpush1.msra.mxu0 0.0
    %348 = vmatprep.subr.mxu0 0.0
    %349 = vmatpush1.msra.mxu0 0.0
    %350 = vmatprep.subr.mxu0 0.0
    %351 = vmatpush1.msra.mxu0 0.0
    %352 = vmatprep.subr.mxu0 0.0
    %353 = vmatpush1.msra.mxu0 0.0
    %354 = vmatprep.subr.mxu0 0.0
    %355 = vmatpush1.msra.mxu0 0.0
    %356 = vmatprep.subr.mxu0 0.0
    %357 = vmatpush1.msra.mxu0 0.0
    %358 = vmatprep.subr.mxu0 0.0
    %359 = vmatpush1.msra.mxu0 0.0
    %360 = vmatprep.subr.mxu0 0.0
    %361 = vmatpush1.msra.mxu0 0.0
    %362 = vmatprep.subr.mxu0 0.0
    %363 = vmatpush1.msra.mxu0 0.0
    %364 = vmatprep.subr.mxu0 0.0
    %365 = vmatpush1.msra.mxu0 0.0
    %366 = vmatprep.subr.mxu0 0.0
    %367 = vmatpush1.msra.mxu0 0.0
    %368 = vmatprep.subr.mxu0 0.0
    %369 = vmatpush1.msra.mxu0 0.0
    %370 = vmatprep.subr.mxu0 0.0
    %371 = vmatpush1.msra.mxu0 0.0
    %372 = vmatprep.subr.mxu0 0.0
    %373 = vmatpush1.msra.mxu0 0.0
    %374 = vmatprep.mubr.f32.mxu0 0.0
    %375 = vmatmul.mubr.f32.gmra.mrb[0].mxu0 %v103
    %v376 = vpop.f32.mrb[0].mxu0
    %v377 = vadd.f32 %v188, %v376
    %v378 = vpop.f32.mrb[0].mxu0
    %v379 = vadd.f32 %v192, %v378
    %380 = vmatprep.mubr.f32.mxu0 0.0
    %381 = vmatmul.mubr.f32.gmra.mrb[0].mxu0 %v104
    %v382 = vpop.f32.mrb[0].mxu0
    %v383 = vadd.f32 %v188, %v382
    %v384 = vpop.f32.mrb[0].mxu0
    %v385 = vadd.f32 %v192, %v384
    %386 = vmatprep.mubr.f32.mxu0 0.0
    %387 = vmatmul.mubr.f32.gmra.mrb[0].mxu0 %v105
    %v388 = vpop.f32.mrb[0].mxu0
    %v389 = vadd.f32 %v188, %v388
    %v390 = vpop.f32.mrb[0].mxu0
    %v391 = vadd.f32 %v192, %v390
    %392 = vmatprep.mubr.f32.mxu0 0.0
    %393 = vmatmul.mubr.f32.gmra.mrb[0].mxu0 %v106
    %v394 = vpop.f32.mrb[0].mxu0
    %v395 = vadd.f32 %v188, %v394
    %v396 = vpop.f32.mrb[0].mxu0
    %v397 = vadd.f32 %v192, %v396
    %398 = vmatprep.mubr.f32.mxu0 0.0
    %399 = vmatmul.mubr.f32.gmra.mrb[0].mxu0 %v107
    %v400 = vpop.f32.mrb[0].mxu0
    %v401 = vadd.f32 %v188, %v400
    %v402 = vpop.f32.mrb[0].mxu0
    %v403 = vadd.f32 %v192, %v402
    %404 = vmatprep.mubr.f32.mxu0 0.0
    %405 = vmatmul.mubr.f32.gmra.mrb[0].mxu0 %v108
    %v406 = vpop.f32.mrb[0].mxu0
    %v407 = vadd.f32 %v188, %v406
    %v408 = vpop.f32.mrb[0].mxu0
    %v409 = vadd.f32 %v192, %v408
    %410 = vmatprep.mubr.f32.mxu0 0.0
    %411 = vmatmul.mubr.f32.gmra.mrb[0].mxu0 %v109
    %v412 = vpop.f32.mrb[0].mxu0
    %v413 = vadd.f32 %v188, %v412
    %v414 = vpop.f32.mrb[0].mxu0
    %v415 = vadd.f32 %v192, %v414
    %416 = vmatprep.mubr.f32.mxu0 0.0
    %417 = vmatmul.mubr.f32.gmra.mrb[0].mxu0 %v110
    %v418 = vpop.f32.mrb[0].mxu0
    %v419 = vadd.f32 %v188, %v418
    %v420 = vpop.f32.mrb[0].mxu0
    %v421 = vadd.f32 %v192, %v420
    %422 = vdwg.mxu0
    %423 = vst [vmem:[#allocation2] sm:$0xff] %v264
    %424 = vst [vmem:[#allocation2 + $0x8] sm:$0xff] %v266
    %425 = vst [vmem:[#allocation2 + $0x10] sm:$0xff] %v377
    %426 = vst [vmem:[#allocation2 + $0x18] sm:$0xff] %v379
    %427 = vst [vmem:[#allocation2 + $0x20] sm:$0xff] %v270
    %428 = vst [vmem:[#allocation2 + $0x28] sm:$0xff] %v272
    %429 = vst [vmem:[#allocation2 + $0x30] sm:$0xff] %v383
    %430 = vst [vmem:[#allocation2 + $0x38] sm:$0xff] %v385
    %431 = vst [vmem:[#allocation2 + $0x40] sm:$0xff] %v276
    %432 = vst [vmem:[#allocation2 + $0x48] sm:$0xff] %v278
    %433 = vst [vmem:[#allocation2 + $0x50] sm:$0xff] %v389
    %434 = vst [vmem:[#allocation2 + $0x58] sm:$0xff] %v391
    %435 = vst [vmem:[#allocation2 + $0x60] sm:$0xff] %v282
    %436 = vst [vmem:[#allocation2 + $0x68] sm:$0xff] %v284
    %437 = vst [vmem:[#allocation2 + $0x70] sm:$0xff] %v395
    %438 = vst [vmem:[#allocation2 + $0x78] sm:$0xff] %v397
    %439 = vst [vmem:[#allocation2 + $0x80] sm:$0xff] %v288
    %440 = vst [vmem:[#allocation2 + $0x88] sm:$0xff] %v290
    %441 = vst [vmem:[#allocation2 + $0x90] sm:$0xff] %v401
    %442 = vst [vmem:[#allocation2 + $0x98] sm:$0xff] %v403
    %443 = vst [vmem:[#allocation2 + $0xa0] sm:$0xff] %v294
    %444 = vst [vmem:[#allocation2 + $0xa8] sm:$0xff] %v296
    %445 = vst [vmem:[#allocation2 + $0xb0] sm:$0xff] %v407
    %446 = vst [vmem:[#allocation2 + $0xb8] sm:$0xff] %v409
    %447 = vst [vmem:[#allocation2 + $0xc0] sm:$0xff] %v300
    %448 = vst [vmem:[#allocation2 + $0xc8] sm:$0xff] %v302
    %449 = vst [vmem:[#allocation2 + $0xd0] sm:$0xff] %v413
    %450 = vst [vmem:[#allocation2 + $0xd8] sm:$0xff] %v415
    %451 = vst [vmem:[#allocation2 + $0xe0] sm:$0xff] %v306
    %452 = vst [vmem:[#allocation2 + $0xe8] sm:$0xff] %v308
    %453 = vst [vmem:[#allocation2 + $0xf0] sm:$0xff] %v419
    %454 = vst [vmem:[#allocation2 + $0xf8] sm:$0xff] %v421
    %v455 = vld [vmem:[#allocation2] sm:$0xff]
    %v456 = vld [vmem:[#allocation2 + $0x8] sm:$0xff]
    %v457 = vld [vmem:[#allocation2 + $0x10] sm:$0xff]
    %v458 = vld [vmem:[#allocation2 + $0x18] sm:$0xff]
    %v459 = vld [vmem:[#allocation6] sm:$0xff]
    %v460 = vld [vmem:[#allocation6 + $0x8] sm:$0xff]
    %v461 = vld [vmem:[#allocation6 + $0x10] sm:$0xff]
    %v462 = vld [vmem:[#allocation6 + $0x18] sm:$0xff]
    %v463 = vld [vmem:[#allocation6 + $0x20] sm:$0xff]
    %v464 = vld [vmem:[#allocation6 + $0x28] sm:$0xff]
    %v465 = vld [vmem:[#allocation6 + $0x30] sm:$0xff]
    %v466 = vld [vmem:[#allocation6 + $0x38] sm:$0xff]
    %v467 = vld [vmem:[#allocation6 + $0x40] sm:$0xff]
    %v468 = vld [vmem:[#allocation6 + $0x48] sm:$0xff]
    %v469 = vld [vmem:[#allocation6 + $0x50] sm:$0xff]
    %v470 = vld [vmem:[#allocation6 + $0x58] sm:$0xff]
    %v471 = vld [vmem:[#allocation6 + $0x60] sm:$0xff]
    %v472 = vld [vmem:[#allocation6 + $0x68] sm:$0xff]
    %v473 = vld [vmem:[#allocation6 + $0x70] sm:$0xff]
    %v474 = vld [vmem:[#allocation6 + $0x78] sm:$0xff]
    %v475 = vld [vmem:[#allocation6 + $0x80] sm:$0xff]
    %v476 = vld [vmem:[#allocation6 + $0x88] sm:$0xff]
    %v477 = vld [vmem:[#allocation6 + $0x90] sm:$0xff]
    %v478 = vld [vmem:[#allocation6 + $0x98] sm:$0xff]
    %v479 = vld [vmem:[#allocation6 + $0xa0] sm:$0xff]
    %v480 = vld [vmem:[#allocation6 + $0xa8] sm:$0xff]
    %v481 = vld [vmem:[#allocation6 + $0xb0] sm:$0xff]
    %v482 = vld [vmem:[#allocation6 + $0xb8] sm:$0xff]
    %v483 = vld [vmem:[#allocation6 + $0xc0] sm:$0xff]
    %v484 = vld [vmem:[#allocation6 + $0xc8] sm:$0xff]
    %v485 = vld [vmem:[#allocation6 + $0xd0] sm:$0xff]
    %v486 = vld [vmem:[#allocation6 + $0xd8] sm:$0xff]
    %v487 = vld [vmem:[#allocation6 + $0xe0] sm:$0xff]
    %v488 = vld [vmem:[#allocation6 + $0xe8] sm:$0xff]
    %v489 = vld [vmem:[#allocation6 + $0xf0] sm:$0xff]
    %v490 = vld [vmem:[#allocation6 + $0xf8] sm:$0xff]
    %v491 = vld [vmem:[#allocation6 + $0x100] sm:$0xff]
    %v492 = vld [vmem:[#allocation6 + $0x108] sm:$0xff]
    %v493 = vld [vmem:[#allocation6 + $0x110] sm:$0xff]
    %v494 = vld [vmem:[#allocation6 + $0x118] sm:$0xff]
    %v495 = vld [vmem:[#allocation6 + $0x120] sm:$0xff]
    %v496 = vld [vmem:[#allocation6 + $0x128] sm:$0xff]
    %v497 = vld [vmem:[#allocation6 + $0x130] sm:$0xff]
    %v498 = vld [vmem:[#allocation6 + $0x138] sm:$0xff]
    %v499 = vld [vmem:[#allocation6 + $0x140] sm:$0xff]
    %v500 = vld [vmem:[#allocation6 + $0x148] sm:$0xff]
    %v501 = vld [vmem:[#allocation6 + $0x150] sm:$0xff]
    %v502 = vld [vmem:[#allocation6 + $0x158] sm:$0xff]
    %v503 = vld [vmem:[#allocation6 + $0x160] sm:$0xff]
    %v504 = vld [vmem:[#allocation6 + $0x168] sm:$0xff]
    %v505 = vld [vmem:[#allocation6 + $0x170] sm:$0xff]
    %v506 = vld [vmem:[#allocation6 + $0x178] sm:$0xff]
    %v507 = vld [vmem:[#allocation6 + $0x180] sm:$0xff]
    %v508 = vld [vmem:[#allocation6 + $0x188] sm:$0xff]
    %v509 = vld [vmem:[#allocation6 + $0x190] sm:$0xff]
    %v510 = vld [vmem:[#allocation6 + $0x198] sm:$0xff]
    %v511 = vld [vmem:[#allocation6 + $0x1a0] sm:$0xff]
    %v512 = vld [vmem:[#allocation6 + $0x1a8] sm:$0xff]
    %v513 = vld [vmem:[#allocation6 + $0x1b0] sm:$0xff]
    %v514 = vld [vmem:[#allocation6 + $0x1b8] sm:$0xff]
    %v515 = vld [vmem:[#allocation6 + $0x1c0] sm:$0xff]
    %v516 = vld [vmem:[#allocation6 + $0x1c8] sm:$0xff]
    %v517 = vld [vmem:[#allocation6 + $0x1d0] sm:$0xff]
    %v518 = vld [vmem:[#allocation6 + $0x1d8] sm:$0xff]
    %v519 = vld [vmem:[#allocation6 + $0x1e0] sm:$0xff]
    %v520 = vld [vmem:[#allocation6 + $0x1e8] sm:$0xff]
    %v521 = vld [vmem:[#allocation6 + $0x1f0] sm:$0xff]
    %v522 = vld [vmem:[#allocation6 + $0x1f8] sm:$0xff]
    %523 = vmatprep.subr.mxu0 %v460
    %524 = vmatpush1.msra.mxu0 %v459
    %525 = vmatprep.subr.mxu0 %v464
    %526 = vmatpush1.msra.mxu0 %v463
    %527 = vmatprep.subr.mxu0 %v468
    %528 = vmatpush1.msra.mxu0 %v467
    %529 = vmatprep.subr.mxu0 %v472
    %530 = vmatpush1.msra.mxu0 %v471
    %531 = vmatprep.subr.mxu0 %v476
    %532 = vmatpush1.msra.mxu0 %v475
    %533 = vmatprep.subr.mxu0 %v480
    %534 = vmatpush1.msra.mxu0 %v479
    %535 = vmatprep.subr.mxu0 %v484
    %536 = vmatpush1.msra.mxu0 %v483
    %537 = vmatprep.subr.mxu0 %v488
    %538 = vmatpush1.msra.mxu0 %v487
    %539 = vmatprep.subr.mxu0 %v492
    %540 = vmatpush1.msra.mxu0 %v491
    %541 = vmatprep.subr.mxu0 %v496
    %542 = vmatpush1.msra.mxu0 %v495
    %543 = vmatprep.subr.mxu0 %v500
    %544 = vmatpush1.msra.mxu0 %v499
    %545 = vmatprep.subr.mxu0 %v504
    %546 = vmatpush1.msra.mxu0 %v503
    %547 = vmatprep.subr.mxu0 %v508
    %548 = vmatpush1.msra.mxu0 %v507
    %549 = vmatprep.subr.mxu0 %v512
    %550 = vmatpush1.msra.mxu0 %v511
    %551 = vmatprep.subr.mxu0 %v516
    %552 = vmatpush1.msra.mxu0 %v515
    %553 = vmatprep.subr.mxu0 %v520
    %554 = vmatpush1.msra.mxu0 %v519
    %555 = vmatprep.subr.mxu0 0.0
    %556 = vmatpush1.msra.mxu0 0.0
    %557 = vmatprep.subr.mxu0 0.0
    %558 = vmatpush1.msra.mxu0 0.0
    %559 = vmatprep.subr.mxu0 0.0
    %560 = vmatpush1.msra.mxu0 0.0
    %561 = vmatprep.subr.mxu0 0.0
    %562 = vmatpush1.msra.mxu0 0.0
    %563 = vmatprep.subr.mxu0 0.0
    %564 = vmatpush1.msra.mxu0 0.0
    %565 = vmatprep.subr.mxu0 0.0
    %566 = vmatpush1.msra.mxu0 0.0
    %567 = vmatprep.subr.mxu0 0.0
    %568 = vmatpush1.msra.mxu0 0.0
    %569 = vmatprep.subr.mxu0 0.0
    %570 = vmatpush1.msra.mxu0 0.0
    %571 = vmatprep.subr.mxu0 0.0
    %572 = vmatpush1.msra.mxu0 0.0
    %573 = vmatprep.subr.mxu0 0.0
    %574 = vmatpush1.msra.mxu0 0.0
    %575 = vmatprep.subr.mxu0 0.0
    %576 = vmatpush1.msra.mxu0 0.0
    %577 = vmatprep.subr.mxu0 0.0
    %578 = vmatpush1.msra.mxu0 0.0
    %579 = vmatprep.subr.mxu0 0.0
    %580 = vmatpush1.msra.mxu0 0.0
    %581 = vmatprep.subr.mxu0 0.0
    %582 = vmatpush1.msra.mxu0 0.0
    %583 = vmatprep.subr.mxu0 0.0
    %584 = vmatpush1.msra.mxu0 0.0
    %585 = vmatprep.subr.mxu0 0.0
    %586 = vmatpush1.msra.mxu0 0.0
    %587 = vmatprep.mubr.f32.mxu0 0.0
    %588 = vmatmul.mubr.f32.gmra.mrb[0].mxu0 0.0
    %v589 = vpop.f32.mrb[0].mxu0
    %v590 = vadd.f32 0.0, %v589
    %v591 = vpop.f32.mrb[0].mxu0
    %v592 = vadd.f32 0.0, %v591
    %593 = vdwg.mxu0
    %594 = vmatprep.subr.mxu0 %v462
    %595 = vmatpush1.msra.mxu0 %v461
    %596 = vmatprep.subr.mxu0 %v466
    %597 = vmatpush1.msra.mxu0 %v465
    %598 = vmatprep.subr.mxu0 %v470
    %599 = vmatpush1.msra.mxu0 %v469
    %600 = vmatprep.subr.mxu0 %v474
    %601 = vmatpush1.msra.mxu0 %v473
    %602 = vmatprep.subr.mxu0 %v478
    %603 = vmatpush1.msra.mxu0 %v477
    %604 = vmatprep.subr.mxu0 %v482
    %605 = vmatpush1.msra.mxu0 %v481
    %606 = vmatprep.subr.mxu0 %v486
    %607 = vmatpush1.msra.mxu0 %v485
    %608 = vmatprep.subr.mxu0 %v490
    %609 = vmatpush1.msra.mxu0 %v489
    %610 = vmatprep.subr.mxu0 %v494
    %611 = vmatpush1.msra.mxu0 %v493
    %612 = vmatprep.subr.mxu0 %v498
    %613 = vmatpush1.msra.mxu0 %v497
    %614 = vmatprep.subr.mxu0 %v502
    %615 = vmatpush1.msra.mxu0 %v501
    %616 = vmatprep.subr.mxu0 %v506
    %617 = vmatpush1.msra.mxu0 %v505
    %618 = vmatprep.subr.mxu0 %v510
    %619 = vmatpush1.msra.mxu0 %v509
    %620 = vmatprep.subr.mxu0 %v514
    %621 = vmatpush1.msra.mxu0 %v513
    %622 = vmatprep.subr.mxu0 %v518
    %623 = vmatpush1.msra.mxu0 %v517
    %624 = vmatprep.subr.mxu0 %v522
    %625 = vmatpush1.msra.mxu0 %v521
    %626 = vmatprep.subr.mxu0 0.0
    %627 = vmatpush1.msra.mxu0 0.0
    %628 = vmatprep.subr.mxu0 0.0
    %629 = vmatpush1.msra.mxu0 0.0
    %630 = vmatprep.subr.mxu0 0.0
    %631 = vmatpush1.msra.mxu0 0.0
    %632 = vmatprep.subr.mxu0 0.0
    %633 = vmatpush1.msra.mxu0 0.0
    %634 = vmatprep.subr.mxu0 0.0
    %635 = vmatpush1.msra.mxu0 0.0
    %636 = vmatprep.subr.mxu0 0.0
    %637 = vmatpush1.msra.mxu0 0.0
    %638 = vmatprep.subr.mxu0 0.0
    %639 = vmatpush1.msra.mxu0 0.0
    %640 = vmatprep.subr.mxu0 0.0
    %641 = vmatpush1.msra.mxu0 0.0
    %642 = vmatprep.subr.mxu0 0.0
    %643 = vmatpush1.msra.mxu0 0.0
    %644 = vmatprep.subr.mxu0 0.0
    %645 = vmatpush1.msra.mxu0 0.0
    %646 = vmatprep.subr.mxu0 0.0
    %647 = vmatpush1.msra.mxu0 0.0
    %648 = vmatprep.subr.mxu0 0.0
    %649 = vmatpush1.msra.mxu0 0.0
    %650 = vmatprep.subr.mxu0 0.0
    %651 = vmatpush1.msra.mxu0 0.0
    %652 = vmatprep.subr.mxu0 0.0
    %653 = vmatpush1.msra.mxu0 0.0
    %654 = vmatprep.subr.mxu0 0.0
    %655 = vmatpush1.msra.mxu0 0.0
    %656 = vmatprep.subr.mxu0 0.0
    %657 = vmatpush1.msra.mxu0 0.0
    %658 = vmatprep.mubr.f32.mxu0 0.0
    %659 = vmatmul.mubr.f32.gmra.mrb[0].mxu0 0.0
    %v660 = vpop.f32.mrb[0].mxu0
    %v661 = vadd.f32 0.0, %v660
    %v662 = vpop.f32.mrb[0].mxu0
    %v663 = vadd.f32 0.0, %v662
    %664 = vdwg.mxu0
    %v665 = vadd.f32 %v455, %v590
    %v666 = vadd.f32 %v456, %v592
    %v667 = vadd.f32 %v457, %v661
    %v668 = vadd.f32 %v458, %v663
    %v669 = vxor.u32 %v665, 2147483648
    %v670 = vmul.f32 %v669, 1.442695
    %v671 = vpow.pop %v670
    %v672 = vadd.f32 %v671, 1.0
    %v673 = vrcp.pop %v672
    %v674 = vmul.f32 1.0, %v673
    %v675 = vxor.u32 %v666, 2147483648
    %v676 = vmul.f32 %v675, 1.442695
    %v677 = vpow.pop %v676
    %v678 = vadd.f32 %v677, 1.0
    %v679 = vrcp.pop %v678
    %v680 = vmul.f32 1.0, %v679
    %v681 = vtanh.pop %v667
    %v682 = vxor.u32 %v668, 2147483648
    %v683 = vmul.f32 %v682, 1.442695
    %v684 = vpow.pop %v683
    %v685 = vadd.f32 %v684, 1.0
    %v686 = vrcp.pop %v685
    %v687 = vmul.f32 1.0, %v686
    %v688 = vmul.f32 %v680, 0.0
    %v689 = vmul.f32 %v674, %v681
    %v690 = vadd.f32 %v688, %v689
    %v691 = vtanh.pop %v690
    %v692 = vmul.f32 %v687, %v691
    %v693 = vld [vmem:[#allocation2 + $0x20] sm:$0xff]
    %v694 = vld [vmem:[#allocation2 + $0x28] sm:$0xff]
    %v695 = vld [vmem:[#allocation2 + $0x30] sm:$0xff]
    %v696 = vld [vmem:[#allocation2 + $0x38] sm:$0xff]
    %697 = vmatprep.subr.mxu0 %v460
    %698 = vmatpush1.msra.mxu0 %v459
    %699 = vmatprep.subr.mxu0 %v464
    %700 = vmatpush1.msra.mxu0 %v463
    %701 = vmatprep.subr.mxu0 %v468
    %702 = vmatpush1.msra.mxu0 %v467
    %703 = vmatprep.subr.mxu0 %v472
    %704 = vmatpush1.msra.mxu0 %v471
    %705 = vmatprep.subr.mxu0 %v476
    %706 = vmatpush1.msra.mxu0 %v475
    %707 = vmatprep.subr.mxu0 %v480
    %708 = vmatpush1.msra.mxu0 %v479
    %709 = vmatprep.subr.mxu0 %v484
    %710 = vmatpush1.msra.mxu0 %v483
    %711 = vmatprep.subr.mxu0 %v488
    %712 = vmatpush1.msra.mxu0 %v487
    %713 = vmatprep.subr.mxu0 %v492
    %714 = vmatpush1.msra.mxu0 %v491
    %715 = vmatprep.subr.mxu0 %v496
    %716 = vmatpush1.msra.mxu0 %v495
    %717 = vmatprep.subr.mxu0 %v500
    %718 = vmatpush1.msra.mxu0 %v499
    %719 = vmatprep.subr.mxu0 %v504
    %720 = vmatpush1.msra.mxu0 %v503
    %721 = vmatprep.subr.mxu0 %v508
    %722 = vmatpush1.msra.mxu0 %v507
    %723 = vmatprep.subr.mxu0 %v512
    %724 = vmatpush1.msra.mxu0 %v511
    %725 = vmatprep.subr.mxu0 %v516
    %726 = vmatpush1.msra.mxu0 %v515
    %727 = vmatprep.subr.mxu0 %v520
    %728 = vmatpush1.msra.mxu0 %v519
    %729 = vmatprep.subr.mxu0 0.0
    %730 = vmatpush1.msra.mxu0 0.0
    %731 = vmatprep.subr.mxu0 0.0
    %732 = vmatpush1.msra.mxu0 0.0
    %733 = vmatprep.subr.mxu0 0.0
    %734 = vmatpush1.msra.mxu0 0.0
    %735 = vmatprep.subr.mxu0 0.0
    %736 = vmatpush1.msra.mxu0 0.0
    %737 = vmatprep.subr.mxu0 0.0
    %738 = vmatpush1.msra.mxu0 0.0
    %739 = vmatprep.subr.mxu0 0.0
    %740 = vmatpush1.msra.mxu0 0.0
    %741 = vmatprep.subr.mxu0 0.0
    %742 = vmatpush1.msra.mxu0 0.0
    %743 = vmatprep.subr.mxu0 0.0
    %744 = vmatpush1.msra.mxu0 0.0
    %745 = vmatprep.subr.mxu0 0.0
    %746 = vmatpush1.msra.mxu0 0.0
    %747 = vmatprep.subr.mxu0 0.0
    %748 = vmatpush1.msra.mxu0 0.0
    %749 = vmatprep.subr.mxu0 0.0
    %750 = vmatpush1.msra.mxu0 0.0
    %751 = vmatprep.subr.mxu0 0.0
    %752 = vmatpush1.msra.mxu0 0.0
    %753 = vmatprep.subr.mxu0 0.0
    %754 = vmatpush1.msra.mxu0 0.0
    %755 = vmatprep.subr.mxu0 0.0
    %756 = vmatpush1.msra.mxu0 0.0
    %757 = vmatprep.subr.mxu0 0.0
    %758 = vmatpush1.msra.mxu0 0.0
    %759 = vmatprep.subr.mxu0 0.0
    %760 = vmatpush1.msra.mxu0 0.0
    %761 = vmatprep.mubr.f32.mxu0 0.0
    %762 = vmatmul.mubr.f32.gmra.mrb[0].mxu0 %v692
    %v763 = vpop.f32.mrb[0].mxu0
    %v764 = vadd.f32 0.0, %v763
    %v765 = vpop.f32.mrb[0].mxu0
    %v766 = vadd.f32 0.0, %v765
    %767 = vdwg.mxu0
    %768 = vmatprep.subr.mxu0 %v462
    %769 = vmatpush1.msra.mxu0 %v461
    %770 = vmatprep.subr.mxu0 %v466
    %771 = vmatpush1.msra.mxu0 %v465
    %772 = vmatprep.subr.mxu0 %v470
    %773 = vmatpush1.msra.mxu0 %v469
    %774 = vmatprep.subr.mxu0 %v474
    %775 = vmatpush1.msra.mxu0 %v473
    %776 = vmatprep.subr.mxu0 %v478
    %777 = vmatpush1.msra.mxu0 %v477
    %778 = vmatprep.subr.mxu0 %v482
    %779 = vmatpush1.msra.mxu0 %v481
    %780 = vmatprep.subr.mxu0 %v486
    %781 = vmatpush1.msra.mxu0 %v485
    %782 = vmatprep.subr.mxu0 %v490
    %783 = vmatpush1.msra.mxu0 %v489
    %784 = vmatprep.subr.mxu0 %v494
    %785 = vmatpush1.msra.mxu0 %v493
    %786 = vmatprep.subr.mxu0 %v498
    %787 = vmatpush1.msra.mxu0 %v497
    %788 = vmatprep.subr.mxu0 %v502
    %789 = vmatpush1.msra.mxu0 %v501
    %790 = vmatprep.subr.mxu0 %v506
    %791 = vmatpush1.msra.mxu0 %v505
    %792 = vmatprep.subr.mxu0 %v510
    %793 = vmatpush1.msra.mxu0 %v509
    %794 = vmatprep.subr.mxu0 %v514
    %795 = vmatpush1.msra.mxu0 %v513
    %796 = vmatprep.subr.mxu0 %v518
    %797 = vmatpush1.msra.mxu0 %v517
    %798 = vmatprep.subr.mxu0 %v522
    %799 = vmatpush1.msra.mxu0 %v521
    %800 = vmatprep.subr.mxu0 0.0
    %801 = vmatpush1.msra.mxu0 0.0
    %802 = vmatprep.subr.mxu0 0.0
    %803 = vmatpush1.msra.mxu0 0.0
    %804 = vmatprep.subr.mxu0 0.0
    %805 = vmatpush1.msra.mxu0 0.0
    %806 = vmatprep.subr.mxu0 0.0
    %807 = vmatpush1.msra.mxu0 0.0
    %808 = vmatprep.subr.mxu0 0.0
    %809 = vmatpush1.msra.mxu0 0.0
    %810 = vmatprep.subr.mxu0 0.0
    %811 = vmatpush1.msra.mxu0 0.0
    %812 = vmatprep.subr.mxu0 0.0
    %813 = vmatpush1.msra.mxu0 0.0
    %814 = vmatprep.subr.mxu0 0.0
    %815 = vmatpush1.msra.mxu0 0.0
    %816 = vmatprep.subr.mxu0 0.0
    %817 = vmatpush1.msra.mxu0 0.0
    %818 = vmatprep.subr.mxu0 0.0
    %819 = vmatpush1.msra.mxu0 0.0
    %820 = vmatprep.subr.mxu0 0.0
    %821 = vmatpush1.msra.mxu0 0.0
    %822 = vmatprep.subr.mxu0 0.0
    %823 = vmatpush1.msra.mxu0 0.0
    %824 = vmatprep.subr.mxu0 0.0
    %825 = vmatpush1.msra.mxu0 0.0
    %826 = vmatprep.subr.mxu0 0.0
    %827 = vmatpush1.msra.mxu0 0.0
    %828 = vmatprep.subr.mxu0 0.0
    %829 = vmatpush1.msra.mxu0 0.0
    %830 = vmatprep.subr.mxu0 0.0
    %831 = vmatpush1.msra.mxu0 0.0
    %832 = vmatprep.mubr.f32.mxu0 0.0
    %833 = vmatmul.mubr.f32.gmra.mrb[0].mxu0 %v692
    %v834 = vpop.f32.mrb[0].mxu0
    %v835 = vadd.f32 0.0, %v834
    %v836 = vpop.f32.mrb[0].mxu0
    %v837 = vadd.f32 0.0, %v836
    %838 = vdwg.mxu0
    %v839 = vadd.f32 %v693, %v764
    %v840 = vadd.f32 %v694, %v766
    %v841 = vadd.f32 %v695, %v835
    %v842 = vadd.f32 %v696, %v837
    %v843 = vxor.u32 %v839, 2147483648
    %v844 = vmul.f32 %v843, 1.442695
    %v845 = vpow.pop %v844
    %v846 = vadd.f32 %v845, 1.0
    %v847 = vrcp.pop %v846
    %v848 = vmul.f32 1.0, %v847
    %v849 = vxor.u32 %v840, 2147483648
    %v850 = vmul.f32 %v849, 1.442695
    %v851 = vpow.pop %v850
    %v852 = vadd.f32 %v851, 1.0
    %v853 = vrcp.pop %v852
    %v854 = vmul.f32 1.0, %v853
    %v855 = vtanh.pop %v841
    %v856 = vxor.u32 %v842, 2147483648
    %v857 = vmul.f32 %v856, 1.442695
    %v858 = vpow.pop %v857
    %v859 = vadd.f32 %v858, 1.0
    %v860 = vrcp.pop %v859
    %v861 = vmul.f32 1.0, %v860
    %v862 = vmul.f32 %v854, %v690
    %v863 = vmul.f32 %v848, %v855
    %v864 = vadd.f32 %v862, %v863
    %v865 = vtanh.pop %v864
    %v866 = vmul.f32 %v861, %v865
    %v867 = vld [vmem:[#allocation2 + $0x40] sm:$0xff]
    %v868 = vld [vmem:[#allocation2 + $0x48] sm:$0xff]
    %v869 = vld [vmem:[#allocation2 + $0x50] sm:$0xff]
    %v870 = vld [vmem:[#allocation2 + $0x58] sm:$0xff]
    %871 = vmatprep.subr.mxu0 %v460
    %872 = vmatpush1.msra.mxu0 %v459
    %873 = vmatprep.subr.mxu0 %v464
    %874 = vmatpush1.msra.mxu0 %v463
    %875 = vmatprep.subr.mxu0 %v468
    %876 = vmatpush1.msra.mxu0 %v467
    %877 = vmatprep.subr.mxu0 %v472
    %878 = vmatpush1.msra.mxu0 %v471
    %879 = vmatprep.subr.mxu0 %v476
    %880 = vmatpush1.msra.mxu0 %v475
    %881 = vmatprep.subr.mxu0 %v480
    %882 = vmatpush1.msra.mxu0 %v479
    %883 = vmatprep.subr.mxu0 %v484
    %884 = vmatpush1.msra.mxu0 %v483
    %885 = vmatprep.subr.mxu0 %v488
    %886 = vmatpush1.msra.mxu0 %v487
    %887 = vmatprep.subr.mxu0 %v492
    %888 = vmatpush1.msra.mxu0 %v491
    %889 = vmatprep.subr.mxu0 %v496
    %890 = vmatpush1.msra.mxu0 %v495
    %891 = vmatprep.subr.mxu0 %v500
    %892 = vmatpush1.msra.mxu0 %v499
    %893 = vmatprep.subr.mxu0 %v504
    %894 = vmatpush1.msra.mxu0 %v503
    %895 = vmatprep.subr.mxu0 %v508
    %896 = vmatpush1.msra.mxu0 %v507
    %897 = vmatprep.subr.mxu0 %v512
    %898 = vmatpush1.msra.mxu0 %v511
    %899 = vmatprep.subr.mxu0 %v516
    %900 = vmatpush1.msra.mxu0 %v515
    %901 = vmatprep.subr.mxu0 %v520
    %902 = vmatpush1.msra.mxu0 %v519
    %903 = vmatprep.subr.mxu0 0.0
    %904 = vmatpush1.msra.mxu0 0.0
    %905 = vmatprep.subr.mxu0 0.0
    %906 = vmatpush1.msra.mxu0 0.0
    %907 = vmatprep.subr.mxu0 0.0
    %908 = vmatpush1.msra.mxu0 0.0
    %909 = vmatprep.subr.mxu0 0.0
    %910 = vmatpush1.msra.mxu0 0.0
    %911 = vmatprep.subr.mxu0 0.0
    %912 = vmatpush1.msra.mxu0 0.0
    %913 = vmatprep.subr.mxu0 0.0
    %914 = vmatpush1.msra.mxu0 0.0
    %915 = vmatprep.subr.mxu0 0.0
    %916 = vmatpush1.msra.mxu0 0.0
    %917 = vmatprep.subr.mxu0 0.0
    %918 = vmatpush1.msra.mxu0 0.0
    %919 = vmatprep.subr.mxu0 0.0
    %920 = vmatpush1.msra.mxu0 0.0
    %921 = vmatprep.subr.mxu0 0.0
    %922 = vmatpush1.msra.mxu0 0.0
    %923 = vmatprep.subr.mxu0 0.0
    %924 = vmatpush1.msra.mxu0 0.0
    %925 = vmatprep.subr.mxu0 0.0
    %926 = vmatpush1.msra.mxu0 0.0
    %927 = vmatprep.subr.mxu0 0.0
    %928 = vmatpush1.msra.mxu0 0.0
    %929 = vmatprep.subr.mxu0 0.0
    %930 = vmatpush1.msra.mxu0 0.0
    %931 = vmatprep.subr.mxu0 0.0
    %932 = vmatpush1.msra.mxu0 0.0
    %933 = vmatprep.subr.mxu0 0.0
    %934 = vmatpush1.msra.mxu0 0.0
    %935 = vmatprep.mubr.f32.mxu0 0.0
    %936 = vmatmul.mubr.f32.gmra.mrb[0].mxu0 %v866
    %v937 = vpop.f32.mrb[0].mxu0
    %v938 = vadd.f32 0.0, %v937
    %v939 = vpop.f32.mrb[0].mxu0
    %v940 = vadd.f32 0.0, %v939
    %941 = vdwg.mxu0
    %942 = vmatprep.subr.mxu0 %v462
    %943 = vmatpush1.msra.mxu0 %v461
    %944 = vmatprep.subr.mxu0 %v466
    %945 = vmatpush1.msra.mxu0 %v465
    %946 = vmatprep.subr.mxu0 %v470
    %947 = vmatpush1.msra.mxu0 %v469
    %948 = vmatprep.subr.mxu0 %v474
    %949 = vmatpush1.msra.mxu0 %v473
    %950 = vmatprep.subr.mxu0 %v478
    %951 = vmatpush1.msra.mxu0 %v477
    %952 = vmatprep.subr.mxu0 %v482
    %953 = vmatpush1.msra.mxu0 %v481
    %954 = vmatprep.subr.mxu0 %v486
    %955 = vmatpush1.msra.mxu0 %v485
    %956 = vmatprep.subr.mxu0 %v490
    %957 = vmatpush1.msra.mxu0 %v489
    %958 = vmatprep.subr.mxu0 %v494
    %959 = vmatpush1.msra.mxu0 %v493
    %960 = vmatprep.subr.mxu0 %v498
    %961 = vmatpush1.msra.mxu0 %v497
    %962 = vmatprep.subr.mxu0 %v502
    %963 = vmatpush1.msra.mxu0 %v501
    %964 = vmatprep.subr.mxu0 %v506
    %965 = vmatpush1.msra.mxu0 %v505
    %966 = vmatprep.subr.mxu0 %v510
    %967 = vmatpush1.msra.mxu0 %v509
    %968 = vmatprep.subr.mxu0 %v514
    %969 = vmatpush1.msra.mxu0 %v513
    %970 = vmatprep.subr.mxu0 %v518
    %971 = vmatpush1.msra.mxu0 %v517
    %972 = vmatprep.subr.mxu0 %v522
    %973 = vmatpush1.msra.mxu0 %v521
    %974 = vmatprep.subr.mxu0 0.0
    %975 = vmatpush1.msra.mxu0 0.0
    %976 = vmatprep.subr.mxu0 0.0
    %977 = vmatpush1.msra.mxu0 0.0
    %978 = vmatprep.subr.mxu0 0.0
    %979 = vmatpush1.msra.mxu0 0.0
    %980 = vmatprep.subr.mxu0 0.0
    %981 = vmatpush1.msra.mxu0 0.0
    %982 = vmatprep.subr.mxu0 0.0
    %983 = vmatpush1.msra.mxu0 0.0
    %984 = vmatprep.subr.mxu0 0.0
    %985 = vmatpush1.msra.mxu0 0.0
    %986 = vmatprep.subr.mxu0 0.0
    %987 = vmatpush1.msra.mxu0 0.0
    %988 = vmatprep.subr.mxu0 0.0
    %989 = vmatpush1.msra.mxu0 0.0
    %990 = vmatprep.subr.mxu0 0.0
    %991 = vmatpush1.msra.mxu0 0.0
    %992 = vmatprep.subr.mxu0 0.0
    %993 = vmatpush1.msra.mxu0 0.0
    %994 = vmatprep.subr.mxu0 0.0
    %995 = vmatpush1.msra.mxu0 0.0
    %996 = vmatprep.subr.mxu0 0.0
    %997 = vmatpush1.msra.mxu0 0.0
    %998 = vmatprep.subr.mxu0 0.0
    %999 = vmatpush1.msra.mxu0 0.0
    %1000 = vmatprep.subr.mxu0 0.0
    %1001 = vmatpush1.msra.mxu0 0.0
    %1002 = vmatprep.subr.mxu0 0.0
    %1003 = vmatpush1.msra.mxu0 0.0
    %1004 = vmatprep.subr.mxu0 0.0
    %1005 = vmatpush1.msra.mxu0 0.0
    %1006 = vmatprep.mubr.f32.mxu0 0.0
    %1007 = vmatmul.mubr.f32.gmra.mrb[0].mxu0 %v866
    %v1008 = vpop.f32.mrb[0].mxu0
    %v1009 = vadd.f32 0.0, %v1008
    %v1010 = vpop.f32.mrb[0].mxu0
    %v1011 = vadd.f32 0.0, %v1010
    %1012 = vdwg.mxu0
    %v1013 = vadd.f32 %v867, %v938
    %v1014 = vadd.f32 %v868, %v940
    %v1015 = vadd.f32 %v869, %v1009
    %v1016 = vadd.f32 %v870, %v1011
    %v1017 = vxor.u32 %v1013, 2147483648
    %v1018 = vmul.f32 %v1017, 1.442695
    %v1019 = vpow.pop %v1018
    %v1020 = vadd.f32 %v1019, 1.0
    %v1021 = vrcp.pop %v1020
    %v1022 = vmul.f32 1.0, %v1021
    %v1023 = vxor.u32 %v1014, 2147483648
    %v1024 = vmul.f32 %v1023, 1.442695
    %v1025 = vpow.pop %v1024
    %v1026 = vadd.f32 %v1025, 1.0
    %v1027 = vrcp.pop %v1026
    %v1028 = vmul.f32 1.0, %v1027
    %v1029 = vtanh.pop %v1015
    %v1030 = vxor.u32 %v1016, 2147483648
    %v1031 = vmul.f32 %v1030, 1.442695
    %v1032 = vpow.pop %v1031
    %v1033 = vadd.f32 %v1032, 1.0
    %v1034 = vrcp.pop %v1033
    %v1035 = vmul.f32 1.0, %v1034
    %v1036 = vmul.f32 %v1028, %v864
    %v1037 = vmul.f32 %v1022, %v1029
    %v1038 = vadd.f32 %v1036, %v1037
    %v1039 = vtanh.pop %v1038
    %v1040 = vmul.f32 %v1035, %v1039
    %v1041 = vld [vmem:[#allocation2 + $0x60] sm:$0xff]
    %v1042 = vld [vmem:[#allocation2 + $0x68] sm:$0xff]
    %v1043 = vld [vmem:[#allocation2 + $0x70] sm:$0xff]
    %v1044 = vld [vmem:[#allocation2 + $0x78] sm:$0xff]
    %1045 = vmatprep.subr.mxu0 %v460
    %1046 = vmatpush1.msra.mxu0 %v459
    %1047 = vmatprep.subr.mxu0 %v464
    %1048 = vmatpush1.msra.mxu0 %v463
    %1049 = vmatprep.subr.mxu0 %v468
    %1050 = vmatpush1.msra.mxu0 %v467
    %1051 = vmatprep.subr.mxu0 %v472
    %1052 = vmatpush1.msra.mxu0 %v471
    %1053 = vmatprep.subr.mxu0 %v476
    %1054 = vmatpush1.msra.mxu0 %v475
    %1055 = vmatprep.subr.mxu0 %v480
    %1056 = vmatpush1.msra.mxu0 %v479
    %1057 = vmatprep.subr.mxu0 %v484
    %1058 = vmatpush1.msra.mxu0 %v483
    %1059 = vmatprep.subr.mxu0 %v488
    %1060 = vmatpush1.msra.mxu0 %v487
    %1061 = vmatprep.subr.mxu0 %v492
    %1062 = vmatpush1.msra.mxu0 %v491
    %1063 = vmatprep.subr.mxu0 %v496
    %1064 = vmatpush1.msra.mxu0 %v495
    %1065 = vmatprep.subr.mxu0 %v500
    %1066 = vmatpush1.msra.mxu0 %v499
    %1067 = vmatprep.subr.mxu0 %v504
    %1068 = vmatpush1.msra.mxu0 %v503
    %1069 = vmatprep.subr.mxu0 %v508
    %1070 = vmatpush1.msra.mxu0 %v507
    %1071 = vmatprep.subr.mxu0 %v512
    %1072 = vmatpush1.msra.mxu0 %v511
    %1073 = vmatprep.subr.mxu0 %v516
    %1074 = vmatpush1.msra.mxu0 %v515
    %1075 = vmatprep.subr.mxu0 %v520
    %1076 = vmatpush1.msra.mxu0 %v519
    %1077 = vmatprep.subr.mxu0 0.0
    %1078 = vmatpush1.msra.mxu0 0.0
    %1079 = vmatprep.subr.mxu0 0.0
    %1080 = vmatpush1.msra.mxu0 0.0
    %1081 = vmatprep.subr.mxu0 0.0
    %1082 = vmatpush1.msra.mxu0 0.0
    %1083 = vmatprep.subr.mxu0 0.0
    %1084 = vmatpush1.msra.mxu0 0.0
    %1085 = vmatprep.subr.mxu0 0.0
    %1086 = vmatpush1.msra.mxu0 0.0
    %1087 = vmatprep.subr.mxu0 0.0
    %1088 = vmatpush1.msra.mxu0 0.0
    %1089 = vmatprep.subr.mxu0 0.0
    %1090 = vmatpush1.msra.mxu0 0.0
    %1091 = vmatprep.subr.mxu0 0.0
    %1092 = vmatpush1.msra.mxu0 0.0
    %1093 = vmatprep.subr.mxu0 0.0
    %1094 = vmatpush1.msra.mxu0 0.0
    %1095 = vmatprep.subr.mxu0 0.0
    %1096 = vmatpush1.msra.mxu0 0.0
    %1097 = vmatprep.subr.mxu0 0.0
    %1098 = vmatpush1.msra.mxu0 0.0
    %1099 = vmatprep.subr.mxu0 0.0
    %1100 = vmatpush1.msra.mxu0 0.0
    %1101 = vmatprep.subr.mxu0 0.0
    %1102 = vmatpush1.msra.mxu0 0.0
    %1103 = vmatprep.subr.mxu0 0.0
    %1104 = vmatpush1.msra.mxu0 0.0
    %1105 = vmatprep.subr.mxu0 0.0
    %1106 = vmatpush1.msra.mxu0 0.0
    %1107 = vmatprep.subr.mxu0 0.0
    %1108 = vmatpush1.msra.mxu0 0.0
    %1109 = vmatprep.mubr.f32.mxu0 0.0
    %1110 = vmatmul.mubr.f32.gmra.mrb[0].mxu0 %v1040
    %v1111 = vpop.f32.mrb[0].mxu0
    %v1112 = vadd.f32 0.0, %v1111
    %v1113 = vpop.f32.mrb[0].mxu0
    %v1114 = vadd.f32 0.0, %v1113
    %1115 = vdwg.mxu0
    %1116 = vmatprep.subr.mxu0 %v462
    %1117 = vmatpush1.msra.mxu0 %v461
    %1118 = vmatprep.subr.mxu0 %v466
    %1119 = vmatpush1.msra.mxu0 %v465
    %1120 = vmatprep.subr.mxu0 %v470
    %1121 = vmatpush1.msra.mxu0 %v469
    %1122 = vmatprep.subr.mxu0 %v474
    %1123 = vmatpush1.msra.mxu0 %v473
    %1124 = vmatprep.subr.mxu0 %v478
    %1125 = vmatpush1.msra.mxu0 %v477
    %1126 = vmatprep.subr.mxu0 %v482
    %1127 = vmatpush1.msra.mxu0 %v481
    %1128 = vmatprep.subr.mxu0 %v486
    %1129 = vmatpush1.msra.mxu0 %v485
    %1130 = vmatprep.subr.mxu0 %v490
    %1131 = vmatpush1.msra.mxu0 %v489
    %1132 = vmatprep.subr.mxu0 %v494
    %1133 = vmatpush1.msra.mxu0 %v493
    %1134 = vmatprep.subr.mxu0 %v498
    %1135 = vmatpush1.msra.mxu0 %v497
    %1136 = vmatprep.subr.mxu0 %v502
    %1137 = vmatpush1.msra.mxu0 %v501
    %1138 = vmatprep.subr.mxu0 %v506
    %1139 = vmatpush1.msra.mxu0 %v505
    %1140 = vmatprep.subr.mxu0 %v510
    %1141 = vmatpush1.msra.mxu0 %v509
    %1142 = vmatprep.subr.mxu0 %v514
    %1143 = vmatpush1.msra.mxu0 %v513
    %1144 = vmatprep.subr.mxu0 %v518
    %1145 = vmatpush1.msra.mxu0 %v517
    %1146 = vmatprep.subr.mxu0 %v522
    %1147 = vmatpush1.msra.mxu0 %v521
    %1148 = vmatprep.subr.mxu0 0.0
    %1149 = vmatpush1.msra.mxu0 0.0
    %1150 = vmatprep.subr.mxu0 0.0
    %1151 = vmatpush1.msra.mxu0 0.0
    %1152 = vmatprep.subr.mxu0 0.0
    %1153 = vmatpush1.msra.mxu0 0.0
    %1154 = vmatprep.subr.mxu0 0.0
    %1155 = vmatpush1.msra.mxu0 0.0
    %1156 = vmatprep.subr.mxu0 0.0
    %1157 = vmatpush1.msra.mxu0 0.0
    %1158 = vmatprep.subr.mxu0 0.0
    %1159 = vmatpush1.msra.mxu0 0.0
    %1160 = vmatprep.subr.mxu0 0.0
    %1161 = vmatpush1.msra.mxu0 0.0
    %1162 = vmatprep.subr.mxu0 0.0
    %1163 = vmatpush1.msra.mxu0 0.0
    %1164 = vmatprep.subr.mxu0 0.0
    %1165 = vmatpush1.msra.mxu0 0.0
    %1166 = vmatprep.subr.mxu0 0.0
    %1167 = vmatpush1.msra.mxu0 0.0
    %1168 = vmatprep.subr.mxu0 0.0
    %1169 = vmatpush1.msra.mxu0 0.0
    %1170 = vmatprep.subr.mxu0 0.0
    %1171 = vmatpush1.msra.mxu0 0.0
    %1172 = vmatprep.subr.mxu0 0.0
    %1173 = vmatpush1.msra.mxu0 0.0
    %1174 = vmatprep.subr.mxu0 0.0
    %1175 = vmatpush1.msra.mxu0 0.0
    %1176 = vmatprep.subr.mxu0 0.0
    %1177 = vmatpush1.msra.mxu0 0.0
    %1178 = vmatprep.subr.mxu0 0.0
    %1179 = vmatpush1.msra.mxu0 0.0
    %1180 = vmatprep.mubr.f32.mxu0 0.0
    %1181 = vmatmul.mubr.f32.gmra.mrb[0].mxu0 %v1040
    %v1182 = vpop.f32.mrb[0].mxu0
    %v1183 = vadd.f32 0.0, %v1182
    %v1184 = vpop.f32.mrb[0].mxu0
    %v1185 = vadd.f32 0.0, %v1184
    %1186 = vdwg.mxu0
    %v1187 = vadd.f32 %v1041, %v1112
    %v1188 = vadd.f32 %v1042, %v1114
    %v1189 = vadd.f32 %v1043, %v1183
    %v1190 = vadd.f32 %v1044, %v1185
    %v1191 = vxor.u32 %v1187, 2147483648
    %v1192 = vmul.f32 %v1191, 1.442695
    %v1193 = vpow.pop %v1192
    %v1194 = vadd.f32 %v1193, 1.0
    %v1195 = vrcp.pop %v1194
    %v1196 = vmul.f32 1.0, %v1195
    %v1197 = vxor.u32 %v1188, 2147483648
    %v1198 = vmul.f32 %v1197, 1.442695
    %v1199 = vpow.pop %v1198
    %v1200 = vadd.f32 %v1199, 1.0
    %v1201 = vrcp.pop %v1200
    %v1202 = vmul.f32 1.0, %v1201
    %v1203 = vtanh.pop %v1189
    %v1204 = vxor.u32 %v1190, 2147483648
    %v1205 = vmul.f32 %v1204, 1.442695
    %v1206 = vpow.pop %v1205
    %v1207 = vadd.f32 %v1206, 1.0
    %v1208 = vrcp.pop %v1207
    %v1209 = vmul.f32 1.0, %v1208
    %v1210 = vmul.f32 %v1202, %v1038
    %v1211 = vmul.f32 %v1196, %v1203
    %v1212 = vadd.f32 %v1210, %v1211
    %v1213 = vtanh.pop %v1212
    %v1214 = vmul.f32 %v1209, %v1213
    %v1215 = vld [vmem:[#allocation2 + $0x80] sm:$0xff]
    %v1216 = vld [vmem:[#allocation2 + $0x88] sm:$0xff]
    %v1217 = vld [vmem:[#allocation2 + $0x90] sm:$0xff]
    %v1218 = vld [vmem:[#allocation2 + $0x98] sm:$0xff]
    %1219 = vmatprep.subr.mxu0 %v460
    %1220 = vmatpush1.msra.mxu0 %v459
    %1221 = vmatprep.subr.mxu0 %v464
    %1222 = vmatpush1.msra.mxu0 %v463
    %1223 = vmatprep.subr.mxu0 %v468
    %1224 = vmatpush1.msra.mxu0 %v467
    %1225 = vmatprep.subr.mxu0 %v472
    %1226 = vmatpush1.msra.mxu0 %v471
    %1227 = vmatprep.subr.mxu0 %v476
    %1228 = vmatpush1.msra.mxu0 %v475
    %1229 = vmatprep.subr.mxu0 %v480
    %1230 = vmatpush1.msra.mxu0 %v479
    %1231 = vmatprep.subr.mxu0 %v484
    %1232 = vmatpush1.msra.mxu0 %v483
    %1233 = vmatprep.subr.mxu0 %v488
    %1234 = vmatpush1.msra.mxu0 %v487
    %1235 = vmatprep.subr.mxu0 %v492
    %1236 = vmatpush1.msra.mxu0 %v491
    %1237 = vmatprep.subr.mxu0 %v496
    %1238 = vmatpush1.msra.mxu0 %v495
    %1239 = vmatprep.subr.mxu0 %v500
    %1240 = vmatpush1.msra.mxu0 %v499
    %1241 = vmatprep.subr.mxu0 %v504
    %1242 = vmatpush1.msra.mxu0 %v503
    %1243 = vmatprep.subr.mxu0 %v508
    %1244 = vmatpush1.msra.mxu0 %v507
    %1245 = vmatprep.subr.mxu0 %v512
    %1246 = vmatpush1.msra.mxu0 %v511
    %1247 = vmatprep.subr.mxu0 %v516
    %1248 = vmatpush1.msra.mxu0 %v515
    %1249 = vmatprep.subr.mxu0 %v520
    %1250 = vmatpush1.msra.mxu0 %v519
    %1251 = vmatprep.subr.mxu0 0.0
    %1252 = vmatpush1.msra.mxu0 0.0
    %1253 = vmatprep.subr.mxu0 0.0
    %1254 = vmatpush1.msra.mxu0 0.0
    %1255 = vmatprep.subr.mxu0 0.0
    %1256 = vmatpush1.msra.mxu0 0.0
    %1257 = vmatprep.subr.mxu0 0.0
    %1258 = vmatpush1.msra.mxu0 0.0
    %1259 = vmatprep.subr.mxu0 0.0
    %1260 = vmatpush1.msra.mxu0 0.0
    %1261 = vmatprep.subr.mxu0 0.0
    %1262 = vmatpush1.msra.mxu0 0.0
    %1263 = vmatprep.subr.mxu0 0.0
    %1264 = vmatpush1.msra.mxu0 0.0
    %1265 = vmatprep.subr.mxu0 0.0
    %1266 = vmatpush1.msra.mxu0 0.0
    %1267 = vmatprep.subr.mxu0 0.0
    %1268 = vmatpush1.msra.mxu0 0.0
    %1269 = vmatprep.subr.mxu0 0.0
    %1270 = vmatpush1.msra.mxu0 0.0
    %1271 = vmatprep.subr.mxu0 0.0
    %1272 = vmatpush1.msra.mxu0 0.0
    %1273 = vmatprep.subr.mxu0 0.0
    %1274 = vmatpush1.msra.mxu0 0.0
    %1275 = vmatprep.subr.mxu0 0.0
    %1276 = vmatpush1.msra.mxu0 0.0
    %1277 = vmatprep.subr.mxu0 0.0
    %1278 = vmatpush1.msra.mxu0 0.0
    %1279 = vmatprep.subr.mxu0 0.0
    %1280 = vmatpush1.msra.mxu0 0.0
    %1281 = vmatprep.subr.mxu0 0.0
    %1282 = vmatpush1.msra.mxu0 0.0
    %1283 = vmatprep.mubr.f32.mxu0 0.0
    %1284 = vmatmul.mubr.f32.gmra.mrb[0].mxu0 %v1214
    %v1285 = vpop.f32.mrb[0].mxu0
    %v1286 = vadd.f32 0.0, %v1285
    %v1287 = vpop.f32.mrb[0].mxu0
    %v1288 = vadd.f32 0.0, %v1287
    %1289 = vdwg.mxu0
    %1290 = vmatprep.subr.mxu0 %v462
    %1291 = vmatpush1.msra.mxu0 %v461
    %1292 = vmatprep.subr.mxu0 %v466
    %1293 = vmatpush1.msra.mxu0 %v465
    %1294 = vmatprep.subr.mxu0 %v470
    %1295 = vmatpush1.msra.mxu0 %v469
    %1296 = vmatprep.subr.mxu0 %v474
    %1297 = vmatpush1.msra.mxu0 %v473
    %1298 = vmatprep.subr.mxu0 %v478
    %1299 = vmatpush1.msra.mxu0 %v477
    %1300 = vmatprep.subr.mxu0 %v482
    %1301 = vmatpush1.msra.mxu0 %v481
    %1302 = vmatprep.subr.mxu0 %v486
    %1303 = vmatpush1.msra.mxu0 %v485
    %1304 = vmatprep.subr.mxu0 %v490
    %1305 = vmatpush1.msra.mxu0 %v489
    %1306 = vmatprep.subr.mxu0 %v494
    %1307 = vmatpush1.msra.mxu0 %v493
    %1308 = vmatprep.subr.mxu0 %v498
    %1309 = vmatpush1.msra.mxu0 %v497
    %1310 = vmatprep.subr.mxu0 %v502
    %1311 = vmatpush1.msra.mxu0 %v501
    %1312 = vmatprep.subr.mxu0 %v506
    %1313 = vmatpush1.msra.mxu0 %v505
    %1314 = vmatprep.subr.mxu0 %v510
    %1315 = vmatpush1.msra.mxu0 %v509
    %1316 = vmatprep.subr.mxu0 %v514
    %1317 = vmatpush1.msra.mxu0 %v513
    %1318 = vmatprep.subr.mxu0 %v518
    %1319 = vmatpush1.msra.mxu0 %v517
    %1320 = vmatprep.subr.mxu0 %v522
    %1321 = vmatpush1.msra.mxu0 %v521
    %1322 = vmatprep.subr.mxu0 0.0
    %1323 = vmatpush1.msra.mxu0 0.0
    %1324 = vmatprep.subr.mxu0 0.0
    %1325 = vmatpush1.msra.mxu0 0.0
    %1326 = vmatprep.subr.mxu0 0.0
    %1327 = vmatpush1.msra.mxu0 0.0
    %1328 = vmatprep.subr.mxu0 0.0
    %1329 = vmatpush1.msra.mxu0 0.0
    %1330 = vmatprep.subr.mxu0 0.0
    %1331 = vmatpush1.msra.mxu0 0.0
    %1332 = vmatprep.subr.mxu0 0.0
    %1333 = vmatpush1.msra.mxu0 0.0
    %1334 = vmatprep.subr.mxu0 0.0
    %1335 = vmatpush1.msra.mxu0 0.0
    %1336 = vmatprep.subr.mxu0 0.0
    %1337 = vmatpush1.msra.mxu0 0.0
    %1338 = vmatprep.subr.mxu0 0.0
    %1339 = vmatpush1.msra.mxu0 0.0
    %1340 = vmatprep.subr.mxu0 0.0
    %1341 = vmatpush1.msra.mxu0 0.0
    %1342 = vmatprep.subr.mxu0 0.0
    %1343 = vmatpush1.msra.mxu0 0.0
    %1344 = vmatprep.subr.mxu0 0.0
    %1345 = vmatpush1.msra.mxu0 0.0
    %1346 = vmatprep.subr.mxu0 0.0
    %1347 = vmatpush1.msra.mxu0 0.0
    %1348 = vmatprep.subr.mxu0 0.0
    %1349 = vmatpush1.msra.mxu0 0.0
    %1350 = vmatprep.subr.mxu0 0.0
    %1351 = vmatpush1.msra.mxu0 0.0
    %1352 = vmatprep.subr.mxu0 0.0
    %1353 = vmatpush1.msra.mxu0 0.0
    %1354 = vmatprep.mubr.f32.mxu0 0.0
    %1355 = vmatmul.mubr.f32.gmra.mrb[0].mxu0 %v1214
    %v1356 = vpop.f32.mrb[0].mxu0
    %v1357 = vadd.f32 0.0, %v1356
    %v1358 = vpop.f32.mrb[0].mxu0
    %v1359 = vadd.f32 0.0, %v1358
    %1360 = vdwg.mxu0
    %v1361 = vadd.f32 %v1215, %v1286
    %v1362 = vadd.f32 %v1216, %v1288
    %v1363 = vadd.f32 %v1217, %v1357
    %v1364 = vadd.f32 %v1218, %v1359
    %v1365 = vxor.u32 %v1361, 2147483648
    %v1366 = vmul.f32 %v1365, 1.442695
    %v1367 = vpow.pop %v1366
    %v1368 = vadd.f32 %v1367, 1.0
    %v1369 = vrcp.pop %v1368
    %v1370 = vmul.f32 1.0, %v1369
    %v1371 = vxor.u32 %v1362, 2147483648
    %v1372 = vmul.f32 %v1371, 1.442695
    %v1373 = vpow.pop %v1372
    %v1374 = vadd.f32 %v1373, 1.0
    %v1375 = vrcp.pop %v1374
    %v1376 = vmul.f32 1.0, %v1375
    %v1377 = vtanh.pop %v1363
    %v1378 = vxor.u32 %v1364, 2147483648
    %v1379 = vmul.f32 %v1378, 1.442695
    %v1380 = vpow.pop %v1379
    %v1381 = vadd.f32 %v1380, 1.0
    %v1382 = vrcp.pop %v1381
    %v1383 = vmul.f32 1.0, %v1382
    %v1384 = vmul.f32 %v1376, %v1212
    %v1385 = vmul.f32 %v1370, %v1377
    %v1386 = vadd.f32 %v1384, %v1385
    %v1387 = vtanh.pop %v1386
    %v1388 = vmul.f32 %v1383, %v1387
    %v1389 = vld [vmem:[#allocation2 + $0xa0] sm:$0xff]
    %v1390 = vld [vmem:[#allocation2 + $0xa8] sm:$0xff]
    %v1391 = vld [vmem:[#allocation2 + $0xb0] sm:$0xff]
    %v1392 = vld [vmem:[#allocation2 + $0xb8] sm:$0xff]
    %1393 = vmatprep.subr.mxu0 %v460
    %1394 = vmatpush1.msra.mxu0 %v459
    %1395 = vmatprep.subr.mxu0 %v464
    %1396 = vmatpush1.msra.mxu0 %v463
    %1397 = vmatprep.subr.mxu0 %v468
    %1398 = vmatpush1.msra.mxu0 %v467
    %1399 = vmatprep.subr.mxu0 %v472
    %1400 = vmatpush1.msra.mxu0 %v471
    %1401 = vmatprep.subr.mxu0 %v476
    %1402 = vmatpush1.msra.mxu0 %v475
    %1403 = vmatprep.subr.mxu0 %v480
    %1404 = vmatpush1.msra.mxu0 %v479
    %1405 = vmatprep.subr.mxu0 %v484
    %1406 = vmatpush1.msra.mxu0 %v483
    %1407 = vmatprep.subr.mxu0 %v488
    %1408 = vmatpush1.msra.mxu0 %v487
    %1409 = vmatprep.subr.mxu0 %v492
    %1410 = vmatpush1.msra.mxu0 %v491
    %1411 = vmatprep.subr.mxu0 %v496
    %1412 = vmatpush1.msra.mxu0 %v495
    %1413 = vmatprep.subr.mxu0 %v500
    %1414 = vmatpush1.msra.mxu0 %v499
    %1415 = vmatprep.subr.mxu0 %v504
    %1416 = vmatpush1.msra.mxu0 %v503
    %1417 = vmatprep.subr.mxu0 %v508
    %1418 = vmatpush1.msra.mxu0 %v507
    %1419 = vmatprep.subr.mxu0 %v512
    %1420 = vmatpush1.msra.mxu0 %v511
    %1421 = vmatprep.subr.mxu0 %v516
    %1422 = vmatpush1.msra.mxu0 %v515
    %1423 = vmatprep.subr.mxu0 %v520
    %1424 = vmatpush1.msra.mxu0 %v519
    %1425 = vmatprep.subr.mxu0 0.0
    %1426 = vmatpush1.msra.mxu0 0.0
    %1427 = vmatprep.subr.mxu0 0.0
    %1428 = vmatpush1.msra.mxu0 0.0
    %1429 = vmatprep.subr.mxu0 0.0
    %1430 = vmatpush1.msra.mxu0 0.0
    %1431 = vmatprep.subr.mxu0 0.0
    %1432 = vmatpush1.msra.mxu0 0.0
    %1433 = vmatprep.subr.mxu0 0.0
    %1434 = vmatpush1.msra.mxu0 0.0
    %1435 = vmatprep.subr.mxu0 0.0
    %1436 = vmatpush1.msra.mxu0 0.0
    %1437 = vmatprep.subr.mxu0 0.0
    %1438 = vmatpush1.msra.mxu0 0.0
    %1439 = vmatprep.subr.mxu0 0.0
    %1440 = vmatpush1.msra.mxu0 0.0
    %1441 = vmatprep.subr.mxu0 0.0
    %1442 = vmatpush1.msra.mxu0 0.0
    %1443 = vmatprep.subr.mxu0 0.0
    %1444 = vmatpush1.msra.mxu0 0.0
    %1445 = vmatprep.subr.mxu0 0.0
    %1446 = vmatpush1.msra.mxu0 0.0
    %1447 = vmatprep.subr.mxu0 0.0
    %1448 = vmatpush1.msra.mxu0 0.0
    %1449 = vmatprep.subr.mxu0 0.0
    %1450 = vmatpush1.msra.mxu0 0.0
    %1451 = vmatprep.subr.mxu0 0.0
    %1452 = vmatpush1.msra.mxu0 0.0
    %1453 = vmatprep.subr.mxu0 0.0
    %1454 = vmatpush1.msra.mxu0 0.0
    %1455 = vmatprep.subr.mxu0 0.0
    %1456 = vmatpush1.msra.mxu0 0.0
    %1457 = vmatprep.mubr.f32.mxu0 0.0
    %1458 = vmatmul.mubr.f32.gmra.mrb[0].mxu0 %v1388
    %v1459 = vpop.f32.mrb[0].mxu0
    %v1460 = vadd.f32 0.0, %v1459
    %v1461 = vpop.f32.mrb[0].mxu0
    %v1462 = vadd.f32 0.0, %v1461
    %1463 = vdwg.mxu0
    %1464 = vmatprep.subr.mxu0 %v462
    %1465 = vmatpush1.msra.mxu0 %v461
    %1466 = vmatprep.subr.mxu0 %v466
    %1467 = vmatpush1.msra.mxu0 %v465
    %1468 = vmatprep.subr.mxu0 %v470
    %1469 = vmatpush1.msra.mxu0 %v469
    %1470 = vmatprep.subr.mxu0 %v474
    %1471 = vmatpush1.msra.mxu0 %v473
    %1472 = vmatprep.subr.mxu0 %v478
    %1473 = vmatpush1.msra.mxu0 %v477
    %1474 = vmatprep.subr.mxu0 %v482
    %1475 = vmatpush1.msra.mxu0 %v481
    %1476 = vmatprep.subr.mxu0 %v486
    %1477 = vmatpush1.msra.mxu0 %v485
    %1478 = vmatprep.subr.mxu0 %v490
    %1479 = vmatpush1.msra.mxu0 %v489
    %1480 = vmatprep.subr.mxu0 %v494
    %1481 = vmatpush1.msra.mxu0 %v493
    %1482 = vmatprep.subr.mxu0 %v498
    %1483 = vmatpush1.msra.mxu0 %v497
    %1484 = vmatprep.subr.mxu0 %v502
    %1485 = vmatpush1.msra.mxu0 %v501
    %1486 = vmatprep.subr.mxu0 %v506
    %1487 = vmatpush1.msra.mxu0 %v505
    %1488 = vmatprep.subr.mxu0 %v510
    %1489 = vmatpush1.msra.mxu0 %v509
    %1490 = vmatprep.subr.mxu0 %v514
    %1491 = vmatpush1.msra.mxu0 %v513
    %1492 = vmatprep.subr.mxu0 %v518
    %1493 = vmatpush1.msra.mxu0 %v517
    %1494 = vmatprep.subr.mxu0 %v522
    %1495 = vmatpush1.msra.mxu0 %v521
    %1496 = vmatprep.subr.mxu0 0.0
    %1497 = vmatpush1.msra.mxu0 0.0
    %1498 = vmatprep.subr.mxu0 0.0
    %1499 = vmatpush1.msra.mxu0 0.0
    %1500 = vmatprep.subr.mxu0 0.0
    %1501 = vmatpush1.msra.mxu0 0.0
    %1502 = vmatprep.subr.mxu0 0.0
    %1503 = vmatpush1.msra.mxu0 0.0
    %1504 = vmatprep.subr.mxu0 0.0
    %1505 = vmatpush1.msra.mxu0 0.0
    %1506 = vmatprep.subr.mxu0 0.0
    %1507 = vmatpush1.msra.mxu0 0.0
    %1508 = vmatprep.subr.mxu0 0.0
    %1509 = vmatpush1.msra.mxu0 0.0
    %1510 = vmatprep.subr.mxu0 0.0
    %1511 = vmatpush1.msra.mxu0 0.0
    %1512 = vmatprep.subr.mxu0 0.0
    %1513 = vmatpush1.msra.mxu0 0.0
    %1514 = vmatprep.subr.mxu0 0.0
    %1515 = vmatpush1.msra.mxu0 0.0
    %1516 = vmatprep.subr.mxu0 0.0
    %1517 = vmatpush1.msra.mxu0 0.0
    %1518 = vmatprep.subr.mxu0 0.0
    %1519 = vmatpush1.msra.mxu0 0.0
    %1520 = vmatprep.subr.mxu0 0.0
    %1521 = vmatpush1.msra.mxu0 0.0
    %1522 = vmatprep.subr.mxu0 0.0
    %1523 = vmatpush1.msra.mxu0 0.0
    %1524 = vmatprep.subr.mxu0 0.0
    %1525 = vmatpush1.msra.mxu0 0.0
    %1526 = vmatprep.subr.mxu0 0.0
    %1527 = vmatpush1.msra.mxu0 0.0
    %1528 = vmatprep.mubr.f32.mxu0 0.0
    %1529 = vmatmul.mubr.f32.gmra.mrb[0].mxu0 %v1388
    %v1530 = vpop.f32.mrb[0].mxu0
    %v1531 = vadd.f32 0.0, %v1530
    %v1532 = vpop.f32.mrb[0].mxu0
    %v1533 = vadd.f32 0.0, %v1532
    %1534 = vdwg.mxu0
    %v1535 = vadd.f32 %v1389, %v1460
    %v1536 = vadd.f32 %v1390, %v1462
    %v1537 = vadd.f32 %v1391, %v1531
    %v1538 = vadd.f32 %v1392, %v1533
    %v1539 = vxor.u32 %v1535, 2147483648
    %v1540 = vmul.f32 %v1539, 1.442695
    %v1541 = vpow.pop %v1540
    %v1542 = vadd.f32 %v1541, 1.0
    %v1543 = vrcp.pop %v1542
    %v1544 = vmul.f32 1.0, %v1543
    %v1545 = vxor.u32 %v1536, 2147483648
    %v1546 = vmul.f32 %v1545, 1.442695
    %v1547 = vpow.pop %v1546
    %v1548 = vadd.f32 %v1547, 1.0
    %v1549 = vrcp.pop %v1548
    %v1550 = vmul.f32 1.0, %v1549
    %v1551 = vtanh.pop %v1537
    %v1552 = vxor.u32 %v1538, 2147483648
    %v1553 = vmul.f32 %v1552, 1.442695
    %v1554 = vpow.pop %v1553
    %v1555 = vadd.f32 %v1554, 1.0
    %v1556 = vrcp.pop %v1555
    %v1557 = vmul.f32 1.0, %v1556
    %v1558 = vmul.f32 %v1550, %v1386
    %v1559 = vmul.f32 %v1544, %v1551
    %v1560 = vadd.f32 %v1558, %v1559
    %v1561 = vtanh.pop %v1560
    %v1562 = vmul.f32 %v1557, %v1561
    %v1563 = vld [vmem:[#allocation2 + $0xc0] sm:$0xff]
    %v1564 = vld [vmem:[#allocation2 + $0xc8] sm:$0xff]
    %v1565 = vld [vmem:[#allocation2 + $0xd0] sm:$0xff]
    %v1566 = vld [vmem:[#allocation2 + $0xd8] sm:$0xff]
    %1567 = vmatprep.subr.mxu0 %v460
    %1568 = vmatpush1.msra.mxu0 %v459
    %1569 = vmatprep.subr.mxu0 %v464
    %1570 = vmatpush1.msra.mxu0 %v463
    %1571 = vmatprep.subr.mxu0 %v468
    %1572 = vmatpush1.msra.mxu0 %v467
    %1573 = vmatprep.subr.mxu0 %v472
    %1574 = vmatpush1.msra.mxu0 %v471
    %1575 = vmatprep.subr.mxu0 %v476
    %1576 = vmatpush1.msra.mxu0 %v475
    %1577 = vmatprep.subr.mxu0 %v480
    %1578 = vmatpush1.msra.mxu0 %v479
    %1579 = vmatprep.subr.mxu0 %v484
    %1580 = vmatpush1.msra.mxu0 %v483
    %1581 = vmatprep.subr.mxu0 %v488
    %1582 = vmatpush1.msra.mxu0 %v487
    %1583 = vmatprep.subr.mxu0 %v492
    %1584 = vmatpush1.msra.mxu0 %v491
    %1585 = vmatprep.subr.mxu0 %v496
    %1586 = vmatpush1.msra.mxu0 %v495
    %1587 = vmatprep.subr.mxu0 %v500
    %1588 = vmatpush1.msra.mxu0 %v499
    %1589 = vmatprep.subr.mxu0 %v504
    %1590 = vmatpush1.msra.mxu0 %v503
    %1591 = vmatprep.subr.mxu0 %v508
    %1592 = vmatpush1.msra.mxu0 %v507
    %1593 = vmatprep.subr.mxu0 %v512
    %1594 = vmatpush1.msra.mxu0 %v511
    %1595 = vmatprep.subr.mxu0 %v516
    %1596 = vmatpush1.msra.mxu0 %v515
    %1597 = vmatprep.subr.mxu0 %v520
    %1598 = vmatpush1.msra.mxu0 %v519
    %1599 = vmatprep.subr.mxu0 0.0
    %1600 = vmatpush1.msra.mxu0 0.0
    %1601 = vmatprep.subr.mxu0 0.0
    %1602 = vmatpush1.msra.mxu0 0.0
    %1603 = vmatprep.subr.mxu0 0.0
    %1604 = vmatpush1.msra.mxu0 0.0
    %1605 = vmatprep.subr.mxu0 0.0
    %1606 = vmatpush1.msra.mxu0 0.0
    %1607 = vmatprep.subr.mxu0 0.0
    %1608 = vmatpush1.msra.mxu0 0.0
    %1609 = vmatprep.subr.mxu0 0.0
    %1610 = vmatpush1.msra.mxu0 0.0
    %1611 = vmatprep.subr.mxu0 0.0
    %1612 = vmatpush1.msra.mxu0 0.0
    %1613 = vmatprep.subr.mxu0 0.0
    %1614 = vmatpush1.msra.mxu0 0.0
    %1615 = vmatprep.subr.mxu0 0.0
    %1616 = vmatpush1.msra.mxu0 0.0
    %1617 = vmatprep.subr.mxu0 0.0
    %1618 = vmatpush1.msra.mxu0 0.0
    %1619 = vmatprep.subr.mxu0 0.0
    %1620 = vmatpush1.msra.mxu0 0.0
    %1621 = vmatprep.subr.mxu0 0.0
    %1622 = vmatpush1.msra.mxu0 0.0
    %1623 = vmatprep.subr.mxu0 0.0
    %1624 = vmatpush1.msra.mxu0 0.0
    %1625 = vmatprep.subr.mxu0 0.0
    %1626 = vmatpush1.msra.mxu0 0.0
    %1627 = vmatprep.subr.mxu0 0.0
    %1628 = vmatpush1.msra.mxu0 0.0
    %1629 = vmatprep.subr.mxu0 0.0
    %1630 = vmatpush1.msra.mxu0 0.0
    %1631 = vmatprep.mubr.f32.mxu0 0.0
    %1632 = vmatmul.mubr.f32.gmra.mrb[0].mxu0 %v1562
    %v1633 = vpop.f32.mrb[0].mxu0
    %v1634 = vadd.f32 0.0, %v1633
    %v1635 = vpop.f32.mrb[0].mxu0
    %v1636 = vadd.f32 0.0, %v1635
    %1637 = vdwg.mxu0
    %1638 = vmatprep.subr.mxu0 %v462
    %1639 = vmatpush1.msra.mxu0 %v461
    %1640 = vmatprep.subr.mxu0 %v466
    %1641 = vmatpush1.msra.mxu0 %v465
    %1642 = vmatprep.subr.mxu0 %v470
    %1643 = vmatpush1.msra.mxu0 %v469
    %1644 = vmatprep.subr.mxu0 %v474
    %1645 = vmatpush1.msra.mxu0 %v473
    %1646 = vmatprep.subr.mxu0 %v478
    %1647 = vmatpush1.msra.mxu0 %v477
    %1648 = vmatprep.subr.mxu0 %v482
    %1649 = vmatpush1.msra.mxu0 %v481
    %1650 = vmatprep.subr.mxu0 %v486
    %1651 = vmatpush1.msra.mxu0 %v485
    %1652 = vmatprep.subr.mxu0 %v490
    %1653 = vmatpush1.msra.mxu0 %v489
    %1654 = vmatprep.subr.mxu0 %v494
    %1655 = vmatpush1.msra.mxu0 %v493
    %1656 = vmatprep.subr.mxu0 %v498
    %1657 = vmatpush1.msra.mxu0 %v497
    %1658 = vmatprep.subr.mxu0 %v502
    %1659 = vmatpush1.msra.mxu0 %v501
    %1660 = vmatprep.subr.mxu0 %v506
    %1661 = vmatpush1.msra.mxu0 %v505
    %1662 = vmatprep.subr.mxu0 %v510
    %1663 = vmatpush1.msra.mxu0 %v509
    %1664 = vmatprep.subr.mxu0 %v514
    %1665 = vmatpush1.msra.mxu0 %v513
    %1666 = vmatprep.subr.mxu0 %v518
    %1667 = vmatpush1.msra.mxu0 %v517
    %1668 = vmatprep.subr.mxu0 %v522
    %1669 = vmatpush1.msra.mxu0 %v521
    %1670 = vmatprep.subr.mxu0 0.0
    %1671 = vmatpush1.msra.mxu0 0.0
    %1672 = vmatprep.subr.mxu0 0.0
    %1673 = vmatpush1.msra.mxu0 0.0
    %1674 = vmatprep.subr.mxu0 0.0
    %1675 = vmatpush1.msra.mxu0 0.0
    %1676 = vmatprep.subr.mxu0 0.0
    %1677 = vmatpush1.msra.mxu0 0.0
    %1678 = vmatprep.subr.mxu0 0.0
    %1679 = vmatpush1.msra.mxu0 0.0
    %1680 = vmatprep.subr.mxu0 0.0
    %1681 = vmatpush1.msra.mxu0 0.0
    %1682 = vmatprep.subr.mxu0 0.0
    %1683 = vmatpush1.msra.mxu0 0.0
    %1684 = vmatprep.subr.mxu0 0.0
    %1685 = vmatpush1.msra.mxu0 0.0
    %1686 = vmatprep.subr.mxu0 0.0
    %1687 = vmatpush1.msra.mxu0 0.0
    %1688 = vmatprep.subr.mxu0 0.0
    %1689 = vmatpush1.msra.mxu0 0.0
    %1690 = vmatprep.subr.mxu0 0.0
    %1691 = vmatpush1.msra.mxu0 0.0
    %1692 = vmatprep.subr.mxu0 0.0
    %1693 = vmatpush1.msra.mxu0 0.0
    %1694 = vmatprep.subr.mxu0 0.0
    %1695 = vmatpush1.msra.mxu0 0.0
    %1696 = vmatprep.subr.mxu0 0.0
    %1697 = vmatpush1.msra.mxu0 0.0
    %1698 = vmatprep.subr.mxu0 0.0
    %1699 = vmatpush1.msra.mxu0 0.0
    %1700 = vmatprep.subr.mxu0 0.0
    %1701 = vmatpush1.msra.mxu0 0.0
    %1702 = vmatprep.mubr.f32.mxu0 0.0
    %1703 = vmatmul.mubr.f32.gmra.mrb[0].mxu0 %v1562
    %v1704 = vpop.f32.mrb[0].mxu0
    %v1705 = vadd.f32 0.0, %v1704
    %v1706 = vpop.f32.mrb[0].mxu0
    %v1707 = vadd.f32 0.0, %v1706
    %1708 = vdwg.mxu0
    %v1709 = vadd.f32 %v1563, %v1634
    %v1710 = vadd.f32 %v1564, %v1636
    %v1711 = vadd.f32 %v1565, %v1705
    %v1712 = vadd.f32 %v1566, %v1707
    %v1713 = vxor.u32 %v1709, 2147483648
    %v1714 = vmul.f32 %v1713, 1.442695
    %v1715 = vpow.pop %v1714
    %v1716 = vadd.f32 %v1715, 1.0
    %v1717 = vrcp.pop %v1716
    %v1718 = vmul.f32 1.0, %v1717
    %v1719 = vxor.u32 %v1710, 2147483648
    %v1720 = vmul.f32 %v1719, 1.442695
    %v1721 = vpow.pop %v1720
    %v1722 = vadd.f32 %v1721, 1.0
    %v1723 = vrcp.pop %v1722
    %v1724 = vmul.f32 1.0, %v1723
    %v1725 = vtanh.pop %v1711
    %v1726 = vxor.u32 %v1712, 2147483648
    %v1727 = vmul.f32 %v1726, 1.442695
    %v1728 = vpow.pop %v1727
    %v1729 = vadd.f32 %v1728, 1.0
    %v1730 = vrcp.pop %v1729
    %v1731 = vmul.f32 1.0, %v1730
    %v1732 = vmul.f32 %v1724, %v1560
    %v1733 = vmul.f32 %v1718, %v1725
    %v1734 = vadd.f32 %v1732, %v1733
    %v1735 = vtanh.pop %v1734
    %v1736 = vmul.f32 %v1731, %v1735
    %v1737 = vld [vmem:[#allocation2 + $0xe0] sm:$0xff]
    %v1738 = vld [vmem:[#allocation2 + $0xe8] sm:$0xff]
    %v1739 = vld [vmem:[#allocation2 + $0xf0] sm:$0xff]
    %v1740 = vld [vmem:[#allocation2 + $0xf8] sm:$0xff]
    %1741 = vmatprep.subr.mxu0 %v460
    %1742 = vmatpush1.msra.mxu0 %v459
    %1743 = vmatprep.subr.mxu0 %v464
    %1744 = vmatpush1.msra.mxu0 %v463
    %1745 = vmatprep.subr.mxu0 %v468
    %1746 = vmatpush1.msra.mxu0 %v467
    %1747 = vmatprep.subr.mxu0 %v472
    %1748 = vmatpush1.msra.mxu0 %v471
    %1749 = vmatprep.subr.mxu0 %v476
    %1750 = vmatpush1.msra.mxu0 %v475
    %1751 = vmatprep.subr.mxu0 %v480
    %1752 = vmatpush1.msra.mxu0 %v479
    %1753 = vmatprep.subr.mxu0 %v484
    %1754 = vmatpush1.msra.mxu0 %v483
    %1755 = vmatprep.subr.mxu0 %v488
    %1756 = vmatpush1.msra.mxu0 %v487
    %1757 = vmatprep.subr.mxu0 %v492
    %1758 = vmatpush1.msra.mxu0 %v491
    %1759 = vmatprep.subr.mxu0 %v496
    %1760 = vmatpush1.msra.mxu0 %v495
    %1761 = vmatprep.subr.mxu0 %v500
    %1762 = vmatpush1.msra.mxu0 %v499
    %1763 = vmatprep.subr.mxu0 %v504
    %1764 = vmatpush1.msra.mxu0 %v503
    %1765 = vmatprep.subr.mxu0 %v508
    %1766 = vmatpush1.msra.mxu0 %v507
    %1767 = vmatprep.subr.mxu0 %v512
    %1768 = vmatpush1.msra.mxu0 %v511
    %1769 = vmatprep.subr.mxu0 %v516
    %1770 = vmatpush1.msra.mxu0 %v515
    %1771 = vmatprep.subr.mxu0 %v520
    %1772 = vmatpush1.msra.mxu0 %v519
    %1773 = vmatprep.subr.mxu0 0.0
    %1774 = vmatpush1.msra.mxu0 0.0
    %1775 = vmatprep.subr.mxu0 0.0
    %1776 = vmatpush1.msra.mxu0 0.0
    %1777 = vmatprep.subr.mxu0 0.0
    %1778 = vmatpush1.msra.mxu0 0.0
    %1779 = vmatprep.subr.mxu0 0.0
    %1780 = vmatpush1.msra.mxu0 0.0
    %1781 = vmatprep.subr.mxu0 0.0
    %1782 = vmatpush1.msra.mxu0 0.0
    %1783 = vmatprep.subr.mxu0 0.0
    %1784 = vmatpush1.msra.mxu0 0.0
    %1785 = vmatprep.subr.mxu0 0.0
    %1786 = vmatpush1.msra.mxu0 0.0
    %1787 = vmatprep.subr.mxu0 0.0
    %1788 = vmatpush1.msra.mxu0 0.0
    %1789 = vmatprep.subr.mxu0 0.0
    %1790 = vmatpush1.msra.mxu0 0.0
    %1791 = vmatprep.subr.mxu0 0.0
    %1792 = vmatpush1.msra.mxu0 0.0
    %1793 = vmatprep.subr.mxu0 0.0
    %1794 = vmatpush1.msra.mxu0 0.0
    %1795 = vmatprep.subr.mxu0 0.0
    %1796 = vmatpush1.msra.mxu0 0.0
    %1797 = vmatprep.subr.mxu0 0.0
    %1798 = vmatpush1.msra.mxu0 0.0
    %1799 = vmatprep.subr.mxu0 0.0
    %1800 = vmatpush1.msra.mxu0 0.0
    %1801 = vmatprep.subr.mxu0 0.0
    %1802 = vmatpush1.msra.mxu0 0.0
    %1803 = vmatprep.subr.mxu0 0.0
    %1804 = vmatpush1.msra.mxu0 0.0
    %1805 = vmatprep.mubr.f32.mxu0 0.0
    %1806 = vmatmul.mubr.f32.gmra.mrb[0].mxu0 %v1736
    %v1807 = vpop.f32.mrb[0].mxu0
    %v1808 = vadd.f32 0.0, %v1807
    %v1809 = vpop.f32.mrb[0].mxu0
    %v1810 = vadd.f32 0.0, %v1809
    %1811 = vdwg.mxu0
    %1812 = vmatprep.subr.mxu0 %v462
    %1813 = vmatpush1.msra.mxu0 %v461
    %1814 = vmatprep.subr.mxu0 %v466
    %1815 = vmatpush1.msra.mxu0 %v465
    %1816 = vmatprep.subr.mxu0 %v470
    %1817 = vmatpush1.msra.mxu0 %v469
    %1818 = vmatprep.subr.mxu0 %v474
    %1819 = vmatpush1.msra.mxu0 %v473
    %1820 = vmatprep.subr.mxu0 %v478
    %1821 = vmatpush1.msra.mxu0 %v477
    %1822 = vmatprep.subr.mxu0 %v482
    %1823 = vmatpush1.msra.mxu0 %v481
    %1824 = vmatprep.subr.mxu0 %v486
    %1825 = vmatpush1.msra.mxu0 %v485
    %1826 = vmatprep.subr.mxu0 %v490
    %1827 = vmatpush1.msra.mxu0 %v489
    %1828 = vmatprep.subr.mxu0 %v494
    %1829 = vmatpush1.msra.mxu0 %v493
    %1830 = vmatprep.subr.mxu0 %v498
    %1831 = vmatpush1.msra.mxu0 %v497
    %1832 = vmatprep.subr.mxu0 %v502
    %1833 = vmatpush1.msra.mxu0 %v501
    %1834 = vmatprep.subr.mxu0 %v506
    %1835 = vmatpush1.msra.mxu0 %v505
    %1836 = vmatprep.subr.mxu0 %v510
    %1837 = vmatpush1.msra.mxu0 %v509
    %1838 = vmatprep.subr.mxu0 %v514
    %1839 = vmatpush1.msra.mxu0 %v513
    %1840 = vmatprep.subr.mxu0 %v518
    %1841 = vmatpush1.msra.mxu0 %v517
    %1842 = vmatprep.subr.mxu0 %v522
    %1843 = vmatpush1.msra.mxu0 %v521
    %1844 = vmatprep.subr.mxu0 0.0
    %1845 = vmatpush1.msra.mxu0 0.0
    %1846 = vmatprep.subr.mxu0 0.0
    %1847 = vmatpush1.msra.mxu0 0.0
    %1848 = vmatprep.subr.mxu0 0.0
    %1849 = vmatpush1.msra.mxu0 0.0
    %1850 = vmatprep.subr.mxu0 0.0
    %1851 = vmatpush1.msra.mxu0 0.0
    %1852 = vmatprep.subr.mxu0 0.0
    %1853 = vmatpush1.msra.mxu0 0.0
    %1854 = vmatprep.subr.mxu0 0.0
    %1855 = vmatpush1.msra.mxu0 0.0
    %1856 = vmatprep.subr.mxu0 0.0
    %1857 = vmatpush1.msra.mxu0 0.0
    %1858 = vmatprep.subr.mxu0 0.0
    %1859 = vmatpush1.msra.mxu0 0.0
    %1860 = vmatprep.subr.mxu0 0.0
    %1861 = vmatpush1.msra.mxu0 0.0
    %1862 = vmatprep.subr.mxu0 0.0
    %1863 = vmatpush1.msra.mxu0 0.0
    %1864 = vmatprep.subr.mxu0 0.0
    %1865 = vmatpush1.msra.mxu0 0.0
    %1866 = vmatprep.subr.mxu0 0.0
    %1867 = vmatpush1.msra.mxu0 0.0
    %1868 = vmatprep.subr.mxu0 0.0
    %1869 = vmatpush1.msra.mxu0 0.0
    %1870 = vmatprep.subr.mxu0 0.0
    %1871 = vmatpush1.msra.mxu0 0.0
    %1872 = vmatprep.subr.mxu0 0.0
    %1873 = vmatpush1.msra.mxu0 0.0
    %1874 = vmatprep.subr.mxu0 0.0
    %1875 = vmatpush1.msra.mxu0 0.0
    %1876 = vmatprep.mubr.f32.mxu0 0.0
    %1877 = vmatmul.mubr.f32.gmra.mrb[0].mxu0 %v1736
    %v1878 = vpop.f32.mrb[0].mxu0
    %v1879 = vadd.f32 0.0, %v1878
    %v1880 = vpop.f32.mrb[0].mxu0
    %v1881 = vadd.f32 0.0, %v1880
    %1882 = vdwg.mxu0
    %v1883 = vadd.f32 %v1737, %v1808
    %v1884 = vadd.f32 %v1738, %v1810
    %v1885 = vadd.f32 %v1739, %v1879
    %v1886 = vadd.f32 %v1740, %v1881
    %v1887 = vxor.u32 %v1883, 2147483648
    %v1888 = vmul.f32 %v1887, 1.442695
    %v1889 = vpow.pop %v1888
    %v1890 = vadd.f32 %v1889, 1.0
    %v1891 = vrcp.pop %v1890
    %v1892 = vmul.f32 1.0, %v1891
    %v1893 = vxor.u32 %v1884, 2147483648
    %v1894 = vmul.f32 %v1893, 1.442695
    %v1895 = vpow.pop %v1894
    %v1896 = vadd.f32 %v1895, 1.0
    %v1897 = vrcp.pop %v1896
    %v1898 = vmul.f32 1.0, %v1897
    %v1899 = vtanh.pop %v1885
    %v1900 = vxor.u32 %v1886, 2147483648
    %v1901 = vmul.f32 %v1900, 1.442695
    %v1902 = vpow.pop %v1901
    %v1903 = vadd.f32 %v1902, 1.0
    %v1904 = vrcp.pop %v1903
    %v1905 = vmul.f32 1.0, %v1904
    %v1906 = vmul.f32 %v1898, %v1734
    %v1907 = vmul.f32 %v1892, %v1899
    %v1908 = vadd.f32 %v1906, %v1907
    %v1909 = vtanh.pop %v1908
    %v1910 = vmul.f32 %v1905, %v1909
    %v1911 = vld [vmem:[%s4] sm:$0x1]
    %v1913 = vlaneseq
    %v1914 = vshrl.u32 %v1913, 7
    %v1915 = vsub.s32 0, %v1914
    %v1916 = vrot.slane %v1911, %v1915
    %v1918 = vmul.f32 %v1910, %v1916
    %1919 = vadd.xlane.f32.xlu0 %v1918
    %v1920 = vpop.xlane.xlu0 %1919
    %v1921 = vld [vmem:[#allocation3] sm:$0x1]
    %v1923 = vlaneseq
    %v1924 = vshrl.u32 %v1923, 7
    %v1925 = vsub.s32 0, %v1924
    %v1926 = vrot.slane %v1921, %v1925
    %v1928 = vadd.f32 %v1920, %v1926
    %v1929 = vxor.u32 %v1928, 2147483648
    %v1930 = vmul.f32 %v1929, 1.442695
    %v1931 = vpow.pop %v1930
    %v1932 = vadd.f32 %v1931, 1.0
    %v1933 = vrcp.pop %v1932
    %v1934 = vmul.f32 1.0, %v1933
    %1936 = vset.pattern.permute.xlu0 0
    %1937 = vperm.xlu0 %1936, %v1934
    %v1938 = vpop.permute.xlu0 %1937
    %1940 = vst [vmem:[%s6] sm:$0xff] %v1938
    // Predicated region
    $region34: #{scam_detector_forward.1} parent=1 // pred_check
      _
    $region35: #{scam_detector_forward.1} parent=1 // pred_check_branch
      %1942 = sbr.rel (0) target = $region37
    $region36: #{scam_detector_forward.1} parent=1 // pred_region
      _
    $region37: #{scam_detector_forward.1} parent=1 // pred_fallthru
      _
    // Predicated region
    $region38: #{scam_detector_forward.1} parent=1 // pred_check
      _
    $region39: #{scam_detector_forward.1} parent=1 // pred_check_branch
      %1944 = sbr.rel (0) target = $region41
    $region40: #{scam_detector_forward.1} parent=1 // pred_region
      _
    $region41: #{scam_detector_forward.1} parent=1 // pred_fallthru
      _
    %1945 = vsyncpa [#allocation5], 1
    %1946 = vsyncpa [#allocation7], 1

</llo_original>
